<compile_context>
chip_gen: v7x
topology: tpu7x:2x2x1
jax: 0.10.0
libtpu: 0.0.40
codegen_flags: <defaults>
</compile_context>

<pallas_src>
import functools

import numpy as np
import jax
import jax.numpy as jnp
from jax.experimental import pallas as pl
from jax.experimental.pallas import tpu as pltpu


# ----------------------------- Pallas kernel ------------------------------ #

def _convlstm_kernel(act_ref, c_ref, w_ref, b_ref, wc_ref, ch_ref, cc_ref, *,
                     chid):
    # act_ref: (F_pad, R)      bf16  folded im2col [x taps | h taps]
    # c_ref  : (chid, R)       f32   previous cell state
    # w_ref  : (4*chid, F_pad) bf16  packed gate weights, gate order [i,f,g,o]
    # b_ref  : (4*chid, 1)     f32   gate bias
    # wc_ref : (3*chid, R)     f32   peephole [Wci; Wcf; Wco] tiled to block
    # Single MXU matmul (replaces 2*K*K tiny per-tap matmuls), f32 accumulate.
    gates = jnp.dot(w_ref[...], act_ref[...],
                    preferred_element_type=jnp.float32)        # (4*chid, R)
    gates = gates + b_ref[...]                                 # lane broadcast

    gi = gates[0 * chid:1 * chid, :]
    gf = gates[1 * chid:2 * chid, :]
    gg = gates[2 * chid:3 * chid, :]
    go = gates[3 * chid:4 * chid, :]

    c_prev = c_ref[...]
    wc = wc_ref[...]
    wci = wc[0 * chid:1 * chid, :]
    wcf = wc[1 * chid:2 * chid, :]
    wco = wc[2 * chid:3 * chid, :]

    # Gate math in f32; sigmoid/tanh lower to the EUP (separate issue slot).
    i_g = jax.nn.sigmoid(gi + c_prev * wci)
    f_g = jax.nn.sigmoid(gf + c_prev * wcf)
    cc = f_g * c_prev + i_g * jnp.tanh(gg)
    o_g = jax.nn.sigmoid(go + cc * wco)
    ch = o_g * jnp.tanh(cc)

    ch_ref[...] = ch.astype(ch_ref.dtype)
    cc_ref[...] = cc.astype(cc_ref.dtype)


# ------------------------------- helpers ----------------------------------- #

def _im2col_feature_major(a, K, pad):
    """(N, C, W, H) -> (K*K*C, N*W*H): tap-major, channel-minor rows; columns
    ordered n*W*H + w*H + h (matches cell-state / peephole flattening)."""
    N, C, W, H = a.shape
    ap = jnp.pad(a, ((0, 0), (0, 0), (pad, pad), (pad, pad)))
    taps = [ap[:, :, dy:dy + W, dx:dx + H]
            for dy in range(K) for dx in range(K)]              # each (N,C,W,H)
    t = jnp.stack(taps, axis=0)                                 # (T, N, C, W, H)
    t = jnp.transpose(t, (0, 2, 1, 3, 4))                       # (T, C, N, W, H)
    return t.reshape(K * K * C, N * W * H)


def _pick_block_rows(n_samples, rows_per_sample, target=512, cap=2048):
    """Rows per grid block: a multiple of rows_per_sample (keeps the peephole
    tile sample-aligned), as large as possible up to `cap`, preferring >=target
    rows while still leaving >= 2 grid steps for megacore / 2-TC sharding."""
    if rows_per_sample % 128 != 0:
        # Fall back to a single full-extent block so the lane dim stays legal.
        return n_samples * rows_per_sample
    best = rows_per_sample
    for k in range(1, n_samples + 1):
        if n_samples % k:
            continue
        rows = k * rows_per_sample
        if rows > cap:
            break
        best = rows
        if rows >= target and n_samples // k >= 2:
            break
    return best


# ------------------------------- wrapper ----------------------------------- #

def convlstm_cell_forward(x, h, c, params, *, kernel_size):
    """x: (B,S,Cin,W,H); h,c: (B,S,Chid,W,H).  Returns (ch, cc) same layout."""
    B, S, Cin, W, H = x.shape
    Chid = h.shape[2]
    K = kernel_size
    pad = (K - 1) // 2
    N = B * S
    M = W * H
    R_total = N * M

    w_packed = params["w"]                       # (4*Chid, F_pad) bf16
    F_pad = w_packed.shape[1]

    # Folded, lane-dense activation slab (features on sublanes, rows on lanes).
    x_cols = _im2col_feature_major(x.reshape(N, Cin, W, H), K, pad)
    h_cols = _im2col_feature_major(h.reshape(N, Chid, W, H), K, pad)
    act = jnp.concatenate([x_cols, h_cols], axis=0)             # (F, R_total)
    act = jnp.pad(act, ((0, F_pad - act.shape[0]), (0, 0)))
    act = act.astype(jnp.bfloat16)                              # MXU operands

    # Cell state in transposed (Chid, rows) layout, kept in f32.
    c_t = jnp.transpose(c.reshape(N, Chid, W, H), (1, 0, 2, 3))
    c_t = c_t.reshape(Chid, R_total).astype(jnp.float32)

    block_rows = _pick_block_rows(N, M)
    n_blocks = R_total // block_rows
    # Peephole weights repeat per sample; tile once to the block width so the
    # in-kernel multiply is a plain elementwise op with a constant index_map.
    wc_tile = jnp.tile(params["wc"], (1, block_rows // M)).astype(jnp.float32)

    kern = functools.partial(_convlstm_kernel, chid=Chid)
    out_dtype = x.dtype
    ch_t, cc_t = pl.pallas_call(
        kern,
        out_shape=(jax.ShapeDtypeStruct((Chid, R_total), out_dtype),
                   jax.ShapeDtypeStruct((Chid, R_total), out_dtype)),
        grid_spec=pltpu.PrefetchScalarGridSpec(
            num_scalar_prefetch=0,
            grid=(n_blocks,),
            in_specs=[
                pl.BlockSpec((F_pad, block_rows), lambda r: (0, r)),    # act
                pl.BlockSpec((Chid, block_rows), lambda r: (0, r)),     # c
                pl.BlockSpec((4 * Chid, F_pad), lambda r: (0, 0)),      # w
                pl.BlockSpec((4 * Chid, 1), lambda r: (0, 0)),          # bias
                pl.BlockSpec((3 * Chid, block_rows), lambda r: (0, 0)),  # wc
            ],
            out_specs=[
                pl.BlockSpec((Chid, block_rows), lambda r: (0, r)),
                pl.BlockSpec((Chid, block_rows), lambda r: (0, r)),
            ],
        ),
        compiler_params=pltpu.CompilerParams(
            dimension_semantics=("parallel",),
            vmem_limit_bytes=32 * 1024 * 1024,   # explicit; fits v7x's 64 MiB
        ),
    )(act, c_t, w_packed, params["bias"], wc_tile)

    def back(a):
        a = a.reshape(Chid, N, W, H)
        a = jnp.transpose(a, (1, 0, 2, 3))
        return a.reshape(B, S, Chid, W, H)

    return back(ch_t), back(cc_t)


# --------------------------- parameter setup ------------------------------- #

def init_raw_params(key, Cin, Chid, K, W, H, dtype=jnp.float32):
    """Deterministic init of the PyTorch-shaped parameters."""
    keys = jax.random.split(key, 15)

    def conv_w(k, cout, cin):
        bound = 1.0 / np.sqrt(cin * K * K)
        return jax.random.uniform(k, (cout, cin, K, K), dtype, -bound, bound)

    def conv_b(k, cout, cin):
        bound = 1.0 / np.sqrt(cin * K * K)
        return jax.random.uniform(k, (cout,), dtype, -bound, bound)

    raw = {
        "Wxi": conv_w(keys[0], Chid, Cin), "bxi": conv_b(keys[1], Chid, Cin),
        "Wxf": conv_w(keys[2], Chid, Cin), "bxf": conv_b(keys[3], Chid, Cin),
        "Wxc": conv_w(keys[4], Chid, Cin), "bxc": conv_b(keys[5], Chid, Cin),
        "Wxo": conv_w(keys[6], Chid, Cin), "bxo": conv_b(keys[7], Chid, Cin),
        "Whi": conv_w(keys[8], Chid, Chid),
        "Whf": conv_w(keys[9], Chid, Chid),
        "Whc": conv_w(keys[10], Chid, Chid),
        "Who": conv_w(keys[11], Chid, Chid),
        # Peephole weights (init_hidden creates zeros; small random values are
        # used here so the broadcast term is non-trivial — same semantics).
        "Wci": 0.1 * jax.random.normal(keys[12], (1, Chid, W, H), dtype),
        "Wcf": 0.1 * jax.random.normal(keys[13], (1, Chid, W, H), dtype),
        "Wco": 0.1 * jax.random.normal(keys[14], (1, Chid, W, H), dtype),
    }
    return raw


def pack_params(raw, K):
    """Repack PyTorch-layout params into the folded kernel layout."""
    Chid, Cin = raw["Wxi"].shape[0], raw["Wxi"].shape[1]

    wx_all = jnp.concatenate(
        [raw["Wxi"], raw["Wxf"], raw["Wxc"], raw["Wxo"]], axis=0)  # (4C,Cin,K,K)
    wh_all = jnp.concatenate(
        [raw["Whi"], raw["Whf"], raw["Whc"], raw["Who"]], axis=0)  # (4C,Chid,K,K)

    def to_feat(w):
        # (Cout, Cin, K, K) -> (Cout, K*K*Cin): tap-major, channel-minor cols,
        # matching _im2col_feature_major's row ordering.
        return jnp.transpose(w, (0, 2, 3, 1)).reshape(w.shape[0], -1)

    w_packed = jnp.concatenate([to_feat(wx_all), to_feat(wh_all)], axis=1)
    F = w_packed.shape[1]
    F_pad = -(-F // 128) * 128                 # pad contraction to MXU-friendly
    w_packed = jnp.pad(w_packed, ((0, 0), (0, F_pad - F)))
    w_packed = w_packed.astype(jnp.bfloat16)

    bias = jnp.concatenate(
        [raw["bxi"], raw["bxf"], raw["bxc"], raw["bxo"]]).reshape(-1, 1)
    bias = bias.astype(jnp.float32)            # added post-matmul in f32

    def peephole(w):                           # (1, Chid, W, H) -> (Chid, W*H)
        return w.reshape(w.shape[1], -1)

    wc = jnp.concatenate([peephole(raw["Wci"]),
                          peephole(raw["Wcf"]),
                          peephole(raw["Wco"])], axis=0)   # (3*Chid, W*H) f32
    return {"w": w_packed, "bias": bias, "wc": wc.astype(jnp.float32)}


# ------------------------- pure-JAX reference ------------------------------ #

def reference_forward(x, h, c, raw, K, *, cast_matmul_inputs_to_bf16=False):
    pad = (K - 1) // 2
    B, S, Cin, W, H = x.shape
    Chid = h.shape[2]

    def cast(a):
        if cast_matmul_inputs_to_bf16:
            return a.astype(jnp.bfloat16).astype(jnp.float32)
        return a

    xr = cast(x.reshape(-1, Cin, W, H))
    hr = cast(h.reshape(-1, Chid, W, H))
    cr = c.reshape(-1, Chid, W, H)

    def conv(inp, w, b=None):
        out = jax.lax.conv_general_dilated(
            inp, cast(w), (1, 1), [(pad, pad), (pad, pad)],
            dimension_numbers=("NCHW", "OIHW", "NCHW"),
            precision=jax.lax.Precision.HIGHEST)
        if b is not None:
            out = out + b[None, :, None, None]
        return out

    ci = jax.nn.sigmoid(conv(xr, raw["Wxi"], raw["bxi"]) + conv(hr, raw["Whi"])
                        + cr * raw["Wci"])
    cf = jax.nn.sigmoid(conv(xr, raw["Wxf"], raw["bxf"]) + conv(hr, raw["Whf"])
                        + cr * raw["Wcf"])
    cc = cf * cr + ci * jnp.tanh(conv(xr, raw["Wxc"], raw["bxc"])
                                 + conv(hr, raw["Whc"]))
    co = jax.nn.sigmoid(conv(xr, raw["Wxo"], raw["bxo"]) + conv(hr, raw["Who"])
                        + cc * raw["Wco"])
    ch = co * jnp.tanh(cc)
    return ch.reshape(B, S, Chid, W, H), cc.reshape(B, S, Chid, W, H)


# --------------------------------- main ------------------------------------ #

if __name__ == "__main__":
    B, S, Cin, Chid, W, H, K = 2, 4, 4, 32, 16, 16, 3
    assert Chid % 2 == 0

    key = jax.random.PRNGKey(0)
    k_x, k_h, k_c, k_p = jax.random.split(key, 4)
    x = jax.random.normal(k_x, (B, S, Cin, W, H), jnp.float32)
    h = jax.random.normal(k_h, (B, S, Chid, W, H), jnp.float32)
    c = jax.random.normal(k_c, (B, S, Chid, W, H), jnp.float32)

    raw = init_raw_params(k_p, Cin, Chid, K, W, H)
    params = pack_params(raw, K)

    fwd = jax.jit(functools.partial(convlstm_cell_forward, kernel_size=K))
    ch, cc = fwd(x, h, c, params)
    jax.block_until_ready((ch, cc))

    assert ch.shape == (B, S, Chid, W, H) and cc.shape == (B, S, Chid, W, H)

    # Tight structural check: reference with the same bf16 rounding applied to
    # the conv operands (kernel accumulates the bf16 products exactly in f32).
    ch_r16, cc_r16 = reference_forward(x, h, c, raw, K,
                                       cast_matmul_inputs_to_bf16=True)
    assert np.allclose(np.asarray(ch), np.asarray(ch_r16), atol=2e-3, rtol=2e-3)
    assert np.allclose(np.asarray(cc), np.asarray(cc_r16), atol=2e-3, rtol=2e-3)

    # Loose check vs. the pure-f32 HIGHEST-precision reference: bounds the
    # drift introduced by casting the matmul operands to bf16.
    ch_r32, cc_r32 = reference_forward(x, h, c, raw, K)
    assert np.allclose(np.asarray(ch), np.asarray(ch_r32), atol=3e-2, rtol=3e-2)
    assert np.allclose(np.asarray(cc), np.asarray(cc_r32), atol=3e-2, rtol=3e-2)

    print("KERNEL_OK")
</pallas_src>

<mosaic_0001>
module attributes {stable_mosaic.version = 11 : i64} {
  func.func @_convlstm_kernel(%arg0: i32, %arg1: memref<384x512xbf16, #tpu.memory_space<vmem>>, %arg2: memref<32x512xf32, #tpu.memory_space<vmem>>, %arg3: memref<128x384xbf16, #tpu.memory_space<vmem>>, %arg4: memref<128x1xf32, #tpu.memory_space<vmem>>, %arg5: memref<96x512xf32, #tpu.memory_space<vmem>>, %arg6: memref<32x512xf32, #tpu.memory_space<vmem>>, %arg7: memref<32x512xf32, #tpu.memory_space<vmem>>) attributes {dimension_semantics = [#tpu.dimension_semantics<parallel>], iteration_bounds = array<i64: 4>, scalar_prefetch = 0 : i64, scratch_operands = 0 : i64, tpu.core_type = #tpu.core_type<tc>, window_params = [{transform_indices = @transform_0, window_bounds = array<i64: 384, 512>}, {transform_indices = @transform_1, window_bounds = array<i64: 32, 512>}, {pipeline_mode = #tpu.pipeline_mode<synchronous>, transform_indices = @transform_2, window_bounds = array<i64: 128, 384>}, {pipeline_mode = #tpu.pipeline_mode<synchronous>, transform_indices = @transform_3, window_bounds = array<i64: 128, 1>}, {pipeline_mode = #tpu.pipeline_mode<synchronous>, transform_indices = @transform_4, window_bounds = array<i64: 96, 512>}, {transform_indices = @transform_5, window_bounds = array<i64: 32, 512>}, {transform_indices = @transform_6, window_bounds = array<i64: 32, 512>}]} {
    %c0 = arith.constant 0 : index
    %c0_0 = arith.constant 0 : index
    %0 = vector.load %arg3[%c0, %c0_0] : memref<128x384xbf16, #tpu.memory_space<vmem>>, vector<128x384xbf16>
    %c0_1 = arith.constant 0 : index
    %c0_2 = arith.constant 0 : index
    %1 = vector.load %arg1[%c0_1, %c0_2] : memref<384x512xbf16, #tpu.memory_space<vmem>>, vector<384x512xbf16>
    %cst = arith.constant dense<0.000000e+00> : vector<128x512xf32>
    %2 = tpu.matmul %0, %1, %cst {dimension_numbers = #tpu.dot_dimension_numbers<[1], [0], [0], [1], [0, 0, 1, 1], [], []>} : vector<128x384xbf16>, vector<384x512xbf16>, vector<128x512xf32> -> vector<128x512xf32>
    %c0_3 = arith.constant 0 : index
    %c0_4 = arith.constant 0 : index
    %3 = vector.load %arg4[%c0_3, %c0_4] : memref<128x1xf32, #tpu.memory_space<vmem>>, vector<128x1xf32>
    %4 = vector.broadcast %3 : vector<128x1xf32> to vector<128x512xf32>
    %5 = arith.addf %2, %4 : vector<128x512xf32>
    %6 = vector.extract_strided_slice %5 {offsets = [0, 0], sizes = [32, 512], strides = [1, 1]} : vector<128x512xf32> to vector<32x512xf32>
    %7 = vector.extract_strided_slice %5 {offsets = [32, 0], sizes = [32, 512], strides = [1, 1]} : vector<128x512xf32> to vector<32x512xf32>
    %8 = vector.extract_strided_slice %5 {offsets = [64, 0], sizes = [32, 512], strides = [1, 1]} : vector<128x512xf32> to vector<32x512xf32>
    %9 = vector.extract_strided_slice %5 {offsets = [96, 0], sizes = [32, 512], strides = [1, 1]} : vector<128x512xf32> to vector<32x512xf32>
    %c0_5 = arith.constant 0 : index
    %c0_6 = arith.constant 0 : index
    %10 = vector.load %arg2[%c0_5, %c0_6] : memref<32x512xf32, #tpu.memory_space<vmem>>, vector<32x512xf32>
    %c0_7 = arith.constant 0 : index
    %c0_8 = arith.constant 0 : index
    %11 = vector.load %arg5[%c0_7, %c0_8] : memref<96x512xf32, #tpu.memory_space<vmem>>, vector<96x512xf32>
    %12 = vector.extract_strided_slice %11 {offsets = [0, 0], sizes = [32, 512], strides = [1, 1]} : vector<96x512xf32> to vector<32x512xf32>
    %13 = vector.extract_strided_slice %11 {offsets = [32, 0], sizes = [32, 512], strides = [1, 1]} : vector<96x512xf32> to vector<32x512xf32>
    %14 = vector.extract_strided_slice %11 {offsets = [64, 0], sizes = [32, 512], strides = [1, 1]} : vector<96x512xf32> to vector<32x512xf32>
    %15 = arith.mulf %10, %12 : vector<32x512xf32>
    %16 = arith.addf %6, %15 : vector<32x512xf32>
    %17 = arith.negf %16 : vector<32x512xf32>
    %18 = math.exp %17 : vector<32x512xf32>
    %cst_9 = arith.constant 1.000000e+00 : f32
    %19 = vector.broadcast %cst_9 : f32 to vector<32x512xf32>
    %20 = arith.addf %19, %18 : vector<32x512xf32>
    %21 = arith.divf %19, %20 : vector<32x512xf32>
    %22 = arith.mulf %10, %13 : vector<32x512xf32>
    %23 = arith.addf %7, %22 : vector<32x512xf32>
    %24 = arith.negf %23 : vector<32x512xf32>
    %25 = math.exp %24 : vector<32x512xf32>
    %cst_10 = arith.constant 1.000000e+00 : f32
    %26 = vector.broadcast %cst_10 : f32 to vector<32x512xf32>
    %27 = arith.addf %26, %25 : vector<32x512xf32>
    %28 = arith.divf %26, %27 : vector<32x512xf32>
    %29 = arith.mulf %28, %10 : vector<32x512xf32>
    %30 = math.tanh %8 : vector<32x512xf32>
    %31 = arith.mulf %21, %30 : vector<32x512xf32>
    %32 = arith.addf %29, %31 : vector<32x512xf32>
    %33 = arith.mulf %32, %14 : vector<32x512xf32>
    %34 = arith.addf %9, %33 : vector<32x512xf32>
    %35 = arith.negf %34 : vector<32x512xf32>
    %36 = math.exp %35 : vector<32x512xf32>
    %cst_11 = arith.constant 1.000000e+00 : f32
    %37 = vector.broadcast %cst_11 : f32 to vector<32x512xf32>
    %38 = arith.addf %37, %36 : vector<32x512xf32>
    %39 = arith.divf %37, %38 : vector<32x512xf32>
    %40 = math.tanh %32 : vector<32x512xf32>
    %41 = arith.mulf %39, %40 : vector<32x512xf32>
    %c0_12 = arith.constant 0 : index
    %c0_13 = arith.constant 0 : index
    %42 = vector.load %arg6[%c0_12, %c0_13] : memref<32x512xf32, #tpu.memory_space<vmem>>, vector<32x512xf32>
    tpu.vector_store %arg6[%c0_12, %c0_13], %41 {strides = array<i32>} : memref<32x512xf32, #tpu.memory_space<vmem>>, vector<32x512xf32>,
    %c0_14 = arith.constant 0 : index
    %c0_15 = arith.constant 0 : index
    %43 = vector.load %arg7[%c0_14, %c0_15] : memref<32x512xf32, #tpu.memory_space<vmem>>, vector<32x512xf32>
    tpu.vector_store %arg7[%c0_14, %c0_15], %32 {strides = array<i32>} : memref<32x512xf32, #tpu.memory_space<vmem>>, vector<32x512xf32>,
    return
  }
  func.func @transform_0(%arg0: i32) -> (i32, i32) {
    %c0_i32 = arith.constant 0 : i32
    %c0_i32_0 = arith.constant 0 : i32
    return %c0_i32, %arg0 : i32, i32
  }
  func.func @transform_1(%arg0: i32) -> (i32, i32) {
    %c0_i32 = arith.constant 0 : i32
    %c0_i32_0 = arith.constant 0 : i32
    return %c0_i32, %arg0 : i32, i32
  }
  func.func @transform_2(%arg0: i32) -> (i32, i32) {
    %c0_i32 = arith.constant 0 : i32
    %c0_i32_0 = arith.constant 0 : i32
    %c0_i32_1 = arith.constant 0 : i32
    return %c0_i32, %c0_i32_0 : i32, i32
  }
  func.func @transform_3(%arg0: i32) -> (i32, i32) {
    %c0_i32 = arith.constant 0 : i32
    %c0_i32_0 = arith.constant 0 : i32
    %c0_i32_1 = arith.constant 0 : i32
    return %c0_i32, %c0_i32_0 : i32, i32
  }
  func.func @transform_4(%arg0: i32) -> (i32, i32) {
    %c0_i32 = arith.constant 0 : i32
    %c0_i32_0 = arith.constant 0 : i32
    %c0_i32_1 = arith.constant 0 : i32
    return %c0_i32, %c0_i32_0 : i32, i32
  }
  func.func @transform_5(%arg0: i32) -> (i32, i32) {
    %c0_i32 = arith.constant 0 : i32
    %c0_i32_0 = arith.constant 0 : i32
    return %c0_i32, %arg0 : i32, i32
  }
  func.func @transform_6(%arg0: i32) -> (i32, i32) {
    %c0_i32 = arith.constant 0 : i32
    %c0_i32_0 = arith.constant 0 : i32
    return %c0_i32, %arg0 : i32, i32
  }
}

</mosaic_0001>

<llo_original>
// kernel: convlstm_cell_forward.1
$region0: #{convlstm_cell_forward.1}
  #allocation0 [shape = 'u32[]', space=smem, size = 0x4, offset = 0x4, fixed_abs, tag = 'smem constant byte address 0x4 - core index']
  #allocation1 [shape = 'u32[144,128]{1,0:T(1,128)}', space=vmem, size = 0x12000, scoped, tag = 'internal scratch']
  %s0 = inlined_call_operand.vmem [shape: bf16[384,2048], index: 0, kind: input, shape index: {}]
  %s1 = inlined_call_operand.vmem [shape: f32[32,2048], index: 1, kind: input, shape index: {}]
  %s2 = inlined_call_operand.vmem [shape: bf16[128,384], index: 2, kind: input, shape index: {}]
  %s3 = inlined_call_operand.vmem [shape: f32[128,1], index: 3, kind: input, shape index: {}]
  %s4 = inlined_call_operand.vmem [shape: f32[96,512], index: 4, kind: input, shape index: {}]
  %s5 = inlined_call_operand.vmem [shape: f32[32,2048], index: 5, kind: output, shape index: {0}]
  %s6 = inlined_call_operand.vmem [shape: f32[32,2048], index: 6, kind: output, shape index: {1}]
  %7 = xla_tuple %s5, %s6
  %s8 = sld [smem:[#allocation0]]
  $region145: #{convlstm_cell_forward.1} parent=0
    _
  %s10 = ssub.s32 1, %s8
  %s11 = scalar_select 0, %s10, %s8
  $region1: #{convlstm_cell_forward.1} parent=0
    #allocation2 [shape = 'u8[786432]{0}', space=vmem, size = 0xc0000, scoped, tag = 'input window, operand 0']
    #allocation3 [shape = 'u8[131072]{0}', space=vmem, size = 0x20000, scoped, tag = 'input window, operand 1']
    #allocation4 [shape = 'u8[131072]{0}', space=vmem, size = 0x20000, scoped, tag = 'output window, operand 0']
    #allocation5 [shape = 'u8[131072]{0}', space=vmem, size = 0x20000, scoped, tag = 'output window, operand 1']
    loop: start=0, step=1, limit=6
    $region2: #{convlstm_cell_forward.1} parent=1 // loop_pre_header
      _
    $region3: #{convlstm_cell_forward.1} parent=1 // loop_header
      %s13 = sphi 0, %s17
      %p14 = scmp.ge.s32.totalorder %s13, 6
      %s23 = sphi 0, %s25
      %s26 = sphi 0, %s23
      %s27 = sphi 0, %s26
      %s43 = sphi 0, %s27
      %s49 = sphi 0, %s51
      %s52 = sphi 0, %s49
      %s53 = sphi 0, %s52
      %s69 = sphi 0, %s53
      %s73 = sphi 0, %s73
      %s75 = sphi 0, %s73
      %s76 = sphi 0, %s75
      %s90 = sphi 0, %s76
      %s94 = sphi 0, %s94
      %s96 = sphi 0, %s94
      %s97 = sphi 0, %s96
      %s111 = sphi 0, %s97
      %s115 = sphi 0, %s115
      %s117 = sphi 0, %s115
      %s118 = sphi 0, %s117
      %s132 = sphi 0, %s118
      %s138 = sphi 0, %s140
      %s141 = sphi 0, %s138
      %s142 = sphi 0, %s141
      %s158 = sphi 0, %s142
      %s164 = sphi 0, %s166
      %s167 = sphi 0, %s164
      %s168 = sphi 0, %s167
      %s184 = sphi 0, %s168
    $region4: #{convlstm_cell_forward.1} parent=1 // loop_header_branch
      %16 = sbr.rel (%p14) target = $region8
    $region5: #{convlstm_cell_forward.1} parent=1 // loop_body
      %s18 = ssub.s32 %s13, 1
      %s19 = ssub.s32 %s13, 2
      %s20 = sadd.s32 %s13, 1
      %s21 = ssub.s32 %s13, %s20
      %p22 = scmp.eq.s32.totalorder %s21, 0
      %s24 = sadd.s32 %s23, 1
      %s25 = scalar_select %p22, %s23, %s24
      %p28 = pneg %p22
      %p29 = scmp.eq.s32.totalorder %s13, 3
      %p30 = por %p28, %p29
      %p31 = scmp.ne.s32.totalorder %s23, %s26
      %p32 = scmp.eq.s32.totalorder %s13, 0
      %p33 = por %p31, %p32
      %p34 = scmp.ne.s32.totalorder %s23, %s26
      %p35 = scmp.eq.s32.totalorder %s18, 3
      %p36 = por %p34, %p35
      %p37 = scmp.ne.s32.totalorder %s26, %s27
      %p38 = scmp.eq.s32.totalorder %s18, 0
      %p39 = por %p37, %p38
      %p40 = scmp.ne.s32.totalorder %s26, %s27
      %p41 = scmp.eq.s32.totalorder %s19, 3
      %p42 = por %p40, %p41
      %p44 = scmp.ne.s32.totalorder %s27, %s43
      %p45 = scmp.eq.s32.totalorder %s19, 0
      %p46 = por %p44, %p45
      %s47 = ssub.s32 %s13, %s20
      %p48 = scmp.eq.s32.totalorder %s47, 0
      %s50 = sadd.s32 %s49, 1
      %s51 = scalar_select %p48, %s49, %s50
      %p54 = pneg %p48
      %p55 = scmp.eq.s32.totalorder %s13, 3
      %p56 = por %p54, %p55
      %p57 = scmp.ne.s32.totalorder %s49, %s52
      %p58 = scmp.eq.s32.totalorder %s13, 0
      %p59 = por %p57, %p58
      %p60 = scmp.ne.s32.totalorder %s49, %s52
      %p61 = scmp.eq.s32.totalorder %s18, 3
      %p62 = por %p60, %p61
      %p63 = scmp.ne.s32.totalorder %s52, %s53
      %p64 = scmp.eq.s32.totalorder %s18, 0
      %p65 = por %p63, %p64
      %p66 = scmp.ne.s32.totalorder %s52, %s53
      %p67 = scmp.eq.s32.totalorder %s19, 3
      %p68 = por %p66, %p67
      %p70 = scmp.ne.s32.totalorder %s53, %s69
      %p71 = scmp.eq.s32.totalorder %s19, 0
      %p72 = por %p70, %p71
      %s74 = sadd.s32 %s73, 1
      %p77 = scmp.eq.s32.totalorder %s13, 3
      %p78 = scmp.ne.s32.totalorder %s73, %s75
      %p79 = scmp.eq.s32.totalorder %s13, 0
      %p80 = por %p78, %p79
      %p81 = scmp.ne.s32.totalorder %s73, %s75
      %p82 = scmp.eq.s32.totalorder %s18, 3
      %p83 = por %p81, %p82
      %p84 = scmp.ne.s32.totalorder %s75, %s76
      %p85 = scmp.eq.s32.totalorder %s18, 0
      %p86 = por %p84, %p85
      %p87 = scmp.ne.s32.totalorder %s75, %s76
      %p88 = scmp.eq.s32.totalorder %s19, 3
      %p89 = por %p87, %p88
      %p91 = scmp.ne.s32.totalorder %s76, %s90
      %p92 = scmp.eq.s32.totalorder %s19, 0
      %p93 = por %p91, %p92
      %s95 = sadd.s32 %s94, 1
      %p98 = scmp.eq.s32.totalorder %s13, 3
      %p99 = scmp.ne.s32.totalorder %s94, %s96
      %p100 = scmp.eq.s32.totalorder %s13, 0
      %p101 = por %p99, %p100
      %p102 = scmp.ne.s32.totalorder %s94, %s96
      %p103 = scmp.eq.s32.totalorder %s18, 3
      %p104 = por %p102, %p103
      %p105 = scmp.ne.s32.totalorder %s96, %s97
      %p106 = scmp.eq.s32.totalorder %s18, 0
      %p107 = por %p105, %p106
      %p108 = scmp.ne.s32.totalorder %s96, %s97
      %p109 = scmp.eq.s32.totalorder %s19, 3
      %p110 = por %p108, %p109
      %p112 = scmp.ne.s32.totalorder %s97, %s111
      %p113 = scmp.eq.s32.totalorder %s19, 0
      %p114 = por %p112, %p113
      %s116 = sadd.s32 %s115, 1
      %p119 = scmp.eq.s32.totalorder %s13, 3
      %p120 = scmp.ne.s32.totalorder %s115, %s117
      %p121 = scmp.eq.s32.totalorder %s13, 0
      %p122 = por %p120, %p121
      %p123 = scmp.ne.s32.totalorder %s115, %s117
      %p124 = scmp.eq.s32.totalorder %s18, 3
      %p125 = por %p123, %p124
      %p126 = scmp.ne.s32.totalorder %s117, %s118
      %p127 = scmp.eq.s32.totalorder %s18, 0
      %p128 = por %p126, %p127
      %p129 = scmp.ne.s32.totalorder %s117, %s118
      %p130 = scmp.eq.s32.totalorder %s19, 3
      %p131 = por %p129, %p130
      %p133 = scmp.ne.s32.totalorder %s118, %s132
      %p134 = scmp.eq.s32.totalorder %s19, 0
      %p135 = por %p133, %p134
      %s136 = ssub.s32 %s13, %s20
      %p137 = scmp.eq.s32.totalorder %s136, 0
      %s139 = sadd.s32 %s138, 1
      %s140 = scalar_select %p137, %s138, %s139
      %p143 = pneg %p137
      %p144 = scmp.eq.s32.totalorder %s13, 3
      %p145 = por %p143, %p144
      %p146 = scmp.ne.s32.totalorder %s138, %s141
      %p147 = scmp.eq.s32.totalorder %s13, 0
      %p148 = por %p146, %p147
      %p149 = scmp.ne.s32.totalorder %s138, %s141
      %p150 = scmp.eq.s32.totalorder %s18, 3
      %p151 = por %p149, %p150
      %p152 = scmp.ne.s32.totalorder %s141, %s142
      %p153 = scmp.eq.s32.totalorder %s18, 0
      %p154 = por %p152, %p153
      %p155 = scmp.ne.s32.totalorder %s141, %s142
      %p156 = scmp.eq.s32.totalorder %s19, 3
      %p157 = por %p155, %p156
      %p159 = scmp.ne.s32.totalorder %s142, %s158
      %p160 = scmp.eq.s32.totalorder %s19, 0
      %p161 = por %p159, %p160
      %s162 = ssub.s32 %s13, %s20
      %p163 = scmp.eq.s32.totalorder %s162, 0
      %s165 = sadd.s32 %s164, 1
      %s166 = scalar_select %p163, %s164, %s165
      %p169 = pneg %p163
      %p170 = scmp.eq.s32.totalorder %s13, 3
      %p171 = por %p169, %p170
      %p172 = scmp.ne.s32.totalorder %s164, %s167
      %p173 = scmp.eq.s32.totalorder %s13, 0
      %p174 = por %p172, %p173
      %p175 = scmp.ne.s32.totalorder %s164, %s167
      %p176 = scmp.eq.s32.totalorder %s18, 3
      %p177 = por %p175, %p176
      %p178 = scmp.ne.s32.totalorder %s167, %s168
      %p179 = scmp.eq.s32.totalorder %s18, 0
      %p180 = por %p178, %p179
      %p181 = scmp.ne.s32.totalorder %s167, %s168
      %p182 = scmp.eq.s32.totalorder %s19, 3
      %p183 = por %p181, %p182
      %p185 = scmp.ne.s32.totalorder %s168, %s184
      %p186 = scmp.eq.s32.totalorder %s19, 0
      %p187 = por %p185, %p186
      %p188 = scmp.le.s32.totalorder 1, %s13
      %p189 = scmp.lt.s32.totalorder %s13, 5
      %p190 = pnand %p188, %p189
      %p191 = pneg %p190
      // Predicated region
      $region9: #{convlstm_cell_forward.1} parent=5 // pred_check
        _
      $region10: #{convlstm_cell_forward.1} parent=5 // pred_check_branch
        %193 = sbr.rel (%p190) target = $region12
      $region11: #{convlstm_cell_forward.1} parent=5 // pred_region
        %s194 = ssub.s32 %s13, 1
        // Predicated region
        $region13: #{convlstm_cell_forward.1} parent=11 // pred_check
          %p195 = pneg %p86
        $region14: #{convlstm_cell_forward.1} parent=11 // pred_check_branch
          %197 = sbr.rel (%p195) target = $region16
        $region15: #{convlstm_cell_forward.1} parent=11 // pred_region
          _
        $region16: #{convlstm_cell_forward.1} parent=11 // pred_fallthru
          _
        // Predicated region
        $region17: #{convlstm_cell_forward.1} parent=11 // pred_check
          %p198 = pneg %p107
        $region18: #{convlstm_cell_forward.1} parent=11 // pred_check_branch
          %200 = sbr.rel (%p198) target = $region20
        $region19: #{convlstm_cell_forward.1} parent=11 // pred_region
          _
        $region20: #{convlstm_cell_forward.1} parent=11 // pred_fallthru
          _
        // Predicated region
        $region21: #{convlstm_cell_forward.1} parent=11 // pred_check
          %p201 = pneg %p128
        $region22: #{convlstm_cell_forward.1} parent=11 // pred_check_branch
          %203 = sbr.rel (%p201) target = $region24
        $region23: #{convlstm_cell_forward.1} parent=11 // pred_region
          _
        $region24: #{convlstm_cell_forward.1} parent=11 // pred_fallthru
          _
      $region12: #{convlstm_cell_forward.1} parent=5 // pred_fallthru
        _
      %p204 = scmp.lt.s32.totalorder %s13, 4
      // Predicated region
      $region25: #{convlstm_cell_forward.1} parent=5 // pred_check
        %p205 = pneg %p204
      $region26: #{convlstm_cell_forward.1} parent=5 // pred_check_branch
        %207 = sbr.rel (%p205) target = $region28
      $region27: #{convlstm_cell_forward.1} parent=5 // pred_region
        // Predicated region
        $region29: #{convlstm_cell_forward.1} parent=27 // pred_check
          %p208 = pneg %p33
        $region30: #{convlstm_cell_forward.1} parent=27 // pred_check_branch
          %210 = sbr.rel (%p208) target = $region32
        $region31: #{convlstm_cell_forward.1} parent=27 // pred_region
          %s211 = sand.u32 %s23, 1
          %s212 = sand.u32 %s23, 1
          %s213 = smul.addr %s212, 768
          %s214 = scalar_lea.vmem [#allocation2], %s213
          %s215 = smul.u32 4, %s13
          %s216 = smul.addr %s215, 4
          %s217 = scalar_lea.vmem %s0, %s216
          // Predicated region
          $region33: #{convlstm_cell_forward.1} parent=31 // pred_check
            _
          $region34: #{convlstm_cell_forward.1} parent=31 // pred_check_branch
            %219 = sbr.rel (0) target = $region36
          $region35: #{convlstm_cell_forward.1} parent=31 // pred_region
            // Predicated region
            $region37: #{convlstm_cell_forward.1} parent=35 // pred_check
              _
            $region38: #{convlstm_cell_forward.1} parent=35 // pred_check_branch
              %221 = sbr.rel (0) target = $region40
            $region39: #{convlstm_cell_forward.1} parent=35 // pred_region
              loop: start=0, step=1, limit=1
              $region41: #{convlstm_cell_forward.1} parent=39 // loop_pre_header
                _
              $region42: #{convlstm_cell_forward.1} parent=39 // loop_header
                %s223 = sphi 0, %s227
                %p224 = scmp.ge.s32.totalorder %s223, 1
                %s228 = sphi %s217, %s217
                %s229 = sphi %s214, %s214
              $region43: #{convlstm_cell_forward.1} parent=39 // loop_header_branch
                %226 = sbr.rel (%p224) target = $region47
              $region44: #{convlstm_cell_forward.1} parent=39 // loop_body
                %v230 = vld [vmem:[%s228] sm:$0xff]
                %231 = vst [vmem:[%s229] sm:$0xff] %v230
                %v232 = vld [vmem:[%s228 + $0x8] sm:$0xff]
                %233 = vst [vmem:[%s229 + $0x8] sm:$0xff] %v232
                %v234 = vld [vmem:[%s228 + $0x40] sm:$0xff]
                %235 = vst [vmem:[%s229 + $0x10] sm:$0xff] %v234
                %v236 = vld [vmem:[%s228 + $0x48] sm:$0xff]
                %237 = vst [vmem:[%s229 + $0x18] sm:$0xff] %v236
                %v238 = vld [vmem:[%s228 + $0x80] sm:$0xff]
                %239 = vst [vmem:[%s229 + $0x20] sm:$0xff] %v238
                %v240 = vld [vmem:[%s228 + $0x88] sm:$0xff]
                %241 = vst [vmem:[%s229 + $0x28] sm:$0xff] %v240
                %v242 = vld [vmem:[%s228 + $0xc0] sm:$0xff]
                %243 = vst [vmem:[%s229 + $0x30] sm:$0xff] %v242
                %v244 = vld [vmem:[%s228 + $0xc8] sm:$0xff]
                %245 = vst [vmem:[%s229 + $0x38] sm:$0xff] %v244
                %v246 = vld [vmem:[%s228 + $0x100] sm:$0xff]
                %247 = vst [vmem:[%s229 + $0x40] sm:$0xff] %v246
                %v248 = vld [vmem:[%s228 + $0x108] sm:$0xff]
                %249 = vst [vmem:[%s229 + $0x48] sm:$0xff] %v248
                %v250 = vld [vmem:[%s228 + $0x140] sm:$0xff]
                %251 = vst [vmem:[%s229 + $0x50] sm:$0xff] %v250
                %v252 = vld [vmem:[%s228 + $0x148] sm:$0xff]
                %253 = vst [vmem:[%s229 + $0x58] sm:$0xff] %v252
                %v254 = vld [vmem:[%s228 + $0x180] sm:$0xff]
                %255 = vst [vmem:[%s229 + $0x60] sm:$0xff] %v254
                %v256 = vld [vmem:[%s228 + $0x188] sm:$0xff]
                %257 = vst [vmem:[%s229 + $0x68] sm:$0xff] %v256
                %v258 = vld [vmem:[%s228 + $0x1c0] sm:$0xff]
                %259 = vst [vmem:[%s229 + $0x70] sm:$0xff] %v258
                %v260 = vld [vmem:[%s228 + $0x1c8] sm:$0xff]
                %261 = vst [vmem:[%s229 + $0x78] sm:$0xff] %v260
                %v262 = vld [vmem:[%s228 + $0x200] sm:$0xff]
                %263 = vst [vmem:[%s229 + $0x80] sm:$0xff] %v262
                %v264 = vld [vmem:[%s228 + $0x208] sm:$0xff]
                %265 = vst [vmem:[%s229 + $0x88] sm:$0xff] %v264
                %v266 = vld [vmem:[%s228 + $0x240] sm:$0xff]
                %267 = vst [vmem:[%s229 + $0x90] sm:$0xff] %v266
                %v268 = vld [vmem:[%s228 + $0x248] sm:$0xff]
                %269 = vst [vmem:[%s229 + $0x98] sm:$0xff] %v268
                %v270 = vld [vmem:[%s228 + $0x280] sm:$0xff]
                %271 = vst [vmem:[%s229 + $0xa0] sm:$0xff] %v270
                %v272 = vld [vmem:[%s228 + $0x288] sm:$0xff]
                %273 = vst [vmem:[%s229 + $0xa8] sm:$0xff] %v272
                %v274 = vld [vmem:[%s228 + $0x2c0] sm:$0xff]
                %275 = vst [vmem:[%s229 + $0xb0] sm:$0xff] %v274
                %v276 = vld [vmem:[%s228 + $0x2c8] sm:$0xff]
                %277 = vst [vmem:[%s229 + $0xb8] sm:$0xff] %v276
                %v278 = vld [vmem:[%s228 + $0x300] sm:$0xff]
                %279 = vst [vmem:[%s229 + $0xc0] sm:$0xff] %v278
                %v280 = vld [vmem:[%s228 + $0x308] sm:$0xff]
                %281 = vst [vmem:[%s229 + $0xc8] sm:$0xff] %v280
                %v282 = vld [vmem:[%s228 + $0x340] sm:$0xff]
                %283 = vst [vmem:[%s229 + $0xd0] sm:$0xff] %v282
                %v284 = vld [vmem:[%s228 + $0x348] sm:$0xff]
                %285 = vst [vmem:[%s229 + $0xd8] sm:$0xff] %v284
                %v286 = vld [vmem:[%s228 + $0x380] sm:$0xff]
                %287 = vst [vmem:[%s229 + $0xe0] sm:$0xff] %v286
                %v288 = vld [vmem:[%s228 + $0x388] sm:$0xff]
                %289 = vst [vmem:[%s229 + $0xe8] sm:$0xff] %v288
                %v290 = vld [vmem:[%s228 + $0x3c0] sm:$0xff]
                %291 = vst [vmem:[%s229 + $0xf0] sm:$0xff] %v290
                %v292 = vld [vmem:[%s228 + $0x3c8] sm:$0xff]
                %293 = vst [vmem:[%s229 + $0xf8] sm:$0xff] %v292
                %v294 = vld [vmem:[%s228 + $0x400] sm:$0xff]
                %295 = vst [vmem:[%s229 + $0x100] sm:$0xff] %v294
                %v296 = vld [vmem:[%s228 + $0x408] sm:$0xff]
                %297 = vst [vmem:[%s229 + $0x108] sm:$0xff] %v296
                %v298 = vld [vmem:[%s228 + $0x440] sm:$0xff]
                %299 = vst [vmem:[%s229 + $0x110] sm:$0xff] %v298
                %v300 = vld [vmem:[%s228 + $0x448] sm:$0xff]
                %301 = vst [vmem:[%s229 + $0x118] sm:$0xff] %v300
                %v302 = vld [vmem:[%s228 + $0x480] sm:$0xff]
                %303 = vst [vmem:[%s229 + $0x120] sm:$0xff] %v302
                %v304 = vld [vmem:[%s228 + $0x488] sm:$0xff]
                %305 = vst [vmem:[%s229 + $0x128] sm:$0xff] %v304
                %v306 = vld [vmem:[%s228 + $0x4c0] sm:$0xff]
                %307 = vst [vmem:[%s229 + $0x130] sm:$0xff] %v306
                %v308 = vld [vmem:[%s228 + $0x4c8] sm:$0xff]
                %309 = vst [vmem:[%s229 + $0x138] sm:$0xff] %v308
                %v310 = vld [vmem:[%s228 + $0x500] sm:$0xff]
                %311 = vst [vmem:[%s229 + $0x140] sm:$0xff] %v310
                %v312 = vld [vmem:[%s228 + $0x508] sm:$0xff]
                %313 = vst [vmem:[%s229 + $0x148] sm:$0xff] %v312
                %v314 = vld [vmem:[%s228 + $0x540] sm:$0xff]
                %315 = vst [vmem:[%s229 + $0x150] sm:$0xff] %v314
                %v316 = vld [vmem:[%s228 + $0x548] sm:$0xff]
                %317 = vst [vmem:[%s229 + $0x158] sm:$0xff] %v316
                %v318 = vld [vmem:[%s228 + $0x580] sm:$0xff]
                %319 = vst [vmem:[%s229 + $0x160] sm:$0xff] %v318
                %v320 = vld [vmem:[%s228 + $0x588] sm:$0xff]
                %321 = vst [vmem:[%s229 + $0x168] sm:$0xff] %v320
                %v322 = vld [vmem:[%s228 + $0x5c0] sm:$0xff]
                %323 = vst [vmem:[%s229 + $0x170] sm:$0xff] %v322
                %v324 = vld [vmem:[%s228 + $0x5c8] sm:$0xff]
                %325 = vst [vmem:[%s229 + $0x178] sm:$0xff] %v324
                %v326 = vld [vmem:[%s228 + $0x600] sm:$0xff]
                %327 = vst [vmem:[%s229 + $0x180] sm:$0xff] %v326
                %v328 = vld [vmem:[%s228 + $0x608] sm:$0xff]
                %329 = vst [vmem:[%s229 + $0x188] sm:$0xff] %v328
                %v330 = vld [vmem:[%s228 + $0x640] sm:$0xff]
                %331 = vst [vmem:[%s229 + $0x190] sm:$0xff] %v330
                %v332 = vld [vmem:[%s228 + $0x648] sm:$0xff]
                %333 = vst [vmem:[%s229 + $0x198] sm:$0xff] %v332
                %v334 = vld [vmem:[%s228 + $0x680] sm:$0xff]
                %335 = vst [vmem:[%s229 + $0x1a0] sm:$0xff] %v334
                %v336 = vld [vmem:[%s228 + $0x688] sm:$0xff]
                %337 = vst [vmem:[%s229 + $0x1a8] sm:$0xff] %v336
                %v338 = vld [vmem:[%s228 + $0x6c0] sm:$0xff]
                %339 = vst [vmem:[%s229 + $0x1b0] sm:$0xff] %v338
                %v340 = vld [vmem:[%s228 + $0x6c8] sm:$0xff]
                %341 = vst [vmem:[%s229 + $0x1b8] sm:$0xff] %v340
                %v342 = vld [vmem:[%s228 + $0x700] sm:$0xff]
                %343 = vst [vmem:[%s229 + $0x1c0] sm:$0xff] %v342
                %v344 = vld [vmem:[%s228 + $0x708] sm:$0xff]
                %345 = vst [vmem:[%s229 + $0x1c8] sm:$0xff] %v344
                %v346 = vld [vmem:[%s228 + $0x740] sm:$0xff]
                %347 = vst [vmem:[%s229 + $0x1d0] sm:$0xff] %v346
                %v348 = vld [vmem:[%s228 + $0x748] sm:$0xff]
                %349 = vst [vmem:[%s229 + $0x1d8] sm:$0xff] %v348
                %v350 = vld [vmem:[%s228 + $0x780] sm:$0xff]
                %351 = vst [vmem:[%s229 + $0x1e0] sm:$0xff] %v350
                %v352 = vld [vmem:[%s228 + $0x788] sm:$0xff]
                %353 = vst [vmem:[%s229 + $0x1e8] sm:$0xff] %v352
                %v354 = vld [vmem:[%s228 + $0x7c0] sm:$0xff]
                %355 = vst [vmem:[%s229 + $0x1f0] sm:$0xff] %v354
                %v356 = vld [vmem:[%s228 + $0x7c8] sm:$0xff]
                %357 = vst [vmem:[%s229 + $0x1f8] sm:$0xff] %v356
                %v358 = vld [vmem:[%s228 + $0x800] sm:$0xff]
                %359 = vst [vmem:[%s229 + $0x200] sm:$0xff] %v358
                %v360 = vld [vmem:[%s228 + $0x808] sm:$0xff]
                %361 = vst [vmem:[%s229 + $0x208] sm:$0xff] %v360
                %v362 = vld [vmem:[%s228 + $0x840] sm:$0xff]
                %363 = vst [vmem:[%s229 + $0x210] sm:$0xff] %v362
                %v364 = vld [vmem:[%s228 + $0x848] sm:$0xff]
                %365 = vst [vmem:[%s229 + $0x218] sm:$0xff] %v364
                %v366 = vld [vmem:[%s228 + $0x880] sm:$0xff]
                %367 = vst [vmem:[%s229 + $0x220] sm:$0xff] %v366
                %v368 = vld [vmem:[%s228 + $0x888] sm:$0xff]
                %369 = vst [vmem:[%s229 + $0x228] sm:$0xff] %v368
                %v370 = vld [vmem:[%s228 + $0x8c0] sm:$0xff]
                %371 = vst [vmem:[%s229 + $0x230] sm:$0xff] %v370
                %v372 = vld [vmem:[%s228 + $0x8c8] sm:$0xff]
                %373 = vst [vmem:[%s229 + $0x238] sm:$0xff] %v372
                %v374 = vld [vmem:[%s228 + $0x900] sm:$0xff]
                %375 = vst [vmem:[%s229 + $0x240] sm:$0xff] %v374
                %v376 = vld [vmem:[%s228 + $0x908] sm:$0xff]
                %377 = vst [vmem:[%s229 + $0x248] sm:$0xff] %v376
                %v378 = vld [vmem:[%s228 + $0x940] sm:$0xff]
                %379 = vst [vmem:[%s229 + $0x250] sm:$0xff] %v378
                %v380 = vld [vmem:[%s228 + $0x948] sm:$0xff]
                %381 = vst [vmem:[%s229 + $0x258] sm:$0xff] %v380
                %v382 = vld [vmem:[%s228 + $0x980] sm:$0xff]
                %383 = vst [vmem:[%s229 + $0x260] sm:$0xff] %v382
                %v384 = vld [vmem:[%s228 + $0x988] sm:$0xff]
                %385 = vst [vmem:[%s229 + $0x268] sm:$0xff] %v384
                %v386 = vld [vmem:[%s228 + $0x9c0] sm:$0xff]
                %387 = vst [vmem:[%s229 + $0x270] sm:$0xff] %v386
                %v388 = vld [vmem:[%s228 + $0x9c8] sm:$0xff]
                %389 = vst [vmem:[%s229 + $0x278] sm:$0xff] %v388
                %v390 = vld [vmem:[%s228 + $0xa00] sm:$0xff]
                %391 = vst [vmem:[%s229 + $0x280] sm:$0xff] %v390
                %v392 = vld [vmem:[%s228 + $0xa08] sm:$0xff]
                %393 = vst [vmem:[%s229 + $0x288] sm:$0xff] %v392
                %v394 = vld [vmem:[%s228 + $0xa40] sm:$0xff]
                %395 = vst [vmem:[%s229 + $0x290] sm:$0xff] %v394
                %v396 = vld [vmem:[%s228 + $0xa48] sm:$0xff]
                %397 = vst [vmem:[%s229 + $0x298] sm:$0xff] %v396
                %v398 = vld [vmem:[%s228 + $0xa80] sm:$0xff]
                %399 = vst [vmem:[%s229 + $0x2a0] sm:$0xff] %v398
                %v400 = vld [vmem:[%s228 + $0xa88] sm:$0xff]
                %401 = vst [vmem:[%s229 + $0x2a8] sm:$0xff] %v400
                %v402 = vld [vmem:[%s228 + $0xac0] sm:$0xff]
                %403 = vst [vmem:[%s229 + $0x2b0] sm:$0xff] %v402
                %v404 = vld [vmem:[%s228 + $0xac8] sm:$0xff]
                %405 = vst [vmem:[%s229 + $0x2b8] sm:$0xff] %v404
                %v406 = vld [vmem:[%s228 + $0xb00] sm:$0xff]
                %407 = vst [vmem:[%s229 + $0x2c0] sm:$0xff] %v406
                %v408 = vld [vmem:[%s228 + $0xb08] sm:$0xff]
                %409 = vst [vmem:[%s229 + $0x2c8] sm:$0xff] %v408
                %v410 = vld [vmem:[%s228 + $0xb40] sm:$0xff]
                %411 = vst [vmem:[%s229 + $0x2d0] sm:$0xff] %v410
                %v412 = vld [vmem:[%s228 + $0xb48] sm:$0xff]
                %413 = vst [vmem:[%s229 + $0x2d8] sm:$0xff] %v412
                %v414 = vld [vmem:[%s228 + $0xb80] sm:$0xff]
                %415 = vst [vmem:[%s229 + $0x2e0] sm:$0xff] %v414
                %v416 = vld [vmem:[%s228 + $0xb88] sm:$0xff]
                %417 = vst [vmem:[%s229 + $0x2e8] sm:$0xff] %v416
                %v418 = vld [vmem:[%s228 + $0xbc0] sm:$0xff]
                %419 = vst [vmem:[%s229 + $0x2f0] sm:$0xff] %v418
                %v420 = vld [vmem:[%s228 + $0xbc8] sm:$0xff]
                %421 = vst [vmem:[%s229 + $0x2f8] sm:$0xff] %v420
              $region45: #{convlstm_cell_forward.1} parent=39 // loop_footer
                %s227 = sadd.s32 1, %s223
              $region46: #{convlstm_cell_forward.1} parent=39 // loop_footer_branch
                %222 = sbr.rel target = $region42
              $region47: #{convlstm_cell_forward.1} parent=39 // loop_exit
                _
            $region40: #{convlstm_cell_forward.1} parent=35 // pred_fallthru
              _
            // Predicated region
            $region48: #{convlstm_cell_forward.1} parent=35 // pred_check
              _
            $region49: #{convlstm_cell_forward.1} parent=35 // pred_check_branch
              %423 = sbr.rel target = $region51
            $region50: #{convlstm_cell_forward.1} parent=35 // pred_region
              _
            $region51: #{convlstm_cell_forward.1} parent=35 // pred_fallthru
              _
          $region36: #{convlstm_cell_forward.1} parent=31 // pred_fallthru
            _
          %424 = vnop
        $region32: #{convlstm_cell_forward.1} parent=27 // pred_fallthru
          _
        // Predicated region
        $region52: #{convlstm_cell_forward.1} parent=27 // pred_check
          %p425 = pneg %p59
        $region53: #{convlstm_cell_forward.1} parent=27 // pred_check_branch
          %427 = sbr.rel (%p425) target = $region55
        $region54: #{convlstm_cell_forward.1} parent=27 // pred_region
          %s428 = sand.u32 %s49, 1
          %s429 = sand.u32 %s49, 1
          %s430 = smul.addr %s429, 128
          %s431 = scalar_lea.vmem [#allocation3], %s430
          %s432 = smul.u32 4, %s13
          %s433 = smul.addr %s432, 8
          %s434 = scalar_lea.vmem %s1, %s433
          // Predicated region
          $region56: #{convlstm_cell_forward.1} parent=54 // pred_check
            _
          $region57: #{convlstm_cell_forward.1} parent=54 // pred_check_branch
            %436 = sbr.rel (0) target = $region59
          $region58: #{convlstm_cell_forward.1} parent=54 // pred_region
            // Predicated region
            $region60: #{convlstm_cell_forward.1} parent=58 // pred_check
              _
            $region61: #{convlstm_cell_forward.1} parent=58 // pred_check_branch
              %438 = sbr.rel (0) target = $region63
            $region62: #{convlstm_cell_forward.1} parent=58 // pred_region
              loop: start=0, step=1, limit=1
              $region64: #{convlstm_cell_forward.1} parent=62 // loop_pre_header
                _
              $region65: #{convlstm_cell_forward.1} parent=62 // loop_header
                %s440 = sphi 0, %s444
                %p441 = scmp.ge.s32.totalorder %s440, 1
                %s445 = sphi %s434, %s434
                %s446 = sphi %s431, %s431
              $region66: #{convlstm_cell_forward.1} parent=62 // loop_header_branch
                %443 = sbr.rel (%p441) target = $region70
              $region67: #{convlstm_cell_forward.1} parent=62 // loop_body
                %v447 = vld [vmem:[%s445] sm:$0xff]
                %448 = vst [vmem:[%s446] sm:$0xff] %v447
                %v449 = vld [vmem:[%s445 + $0x8] sm:$0xff]
                %450 = vst [vmem:[%s446 + $0x8] sm:$0xff] %v449
                %v451 = vld [vmem:[%s445 + $0x10] sm:$0xff]
                %452 = vst [vmem:[%s446 + $0x10] sm:$0xff] %v451
                %v453 = vld [vmem:[%s445 + $0x18] sm:$0xff]
                %454 = vst [vmem:[%s446 + $0x18] sm:$0xff] %v453
                %v455 = vld [vmem:[%s445 + $0x80] sm:$0xff]
                %456 = vst [vmem:[%s446 + $0x20] sm:$0xff] %v455
                %v457 = vld [vmem:[%s445 + $0x88] sm:$0xff]
                %458 = vst [vmem:[%s446 + $0x28] sm:$0xff] %v457
                %v459 = vld [vmem:[%s445 + $0x90] sm:$0xff]
                %460 = vst [vmem:[%s446 + $0x30] sm:$0xff] %v459
                %v461 = vld [vmem:[%s445 + $0x98] sm:$0xff]
                %462 = vst [vmem:[%s446 + $0x38] sm:$0xff] %v461
                %v463 = vld [vmem:[%s445 + $0x100] sm:$0xff]
                %464 = vst [vmem:[%s446 + $0x40] sm:$0xff] %v463
                %v465 = vld [vmem:[%s445 + $0x108] sm:$0xff]
                %466 = vst [vmem:[%s446 + $0x48] sm:$0xff] %v465
                %v467 = vld [vmem:[%s445 + $0x110] sm:$0xff]
                %468 = vst [vmem:[%s446 + $0x50] sm:$0xff] %v467
                %v469 = vld [vmem:[%s445 + $0x118] sm:$0xff]
                %470 = vst [vmem:[%s446 + $0x58] sm:$0xff] %v469
                %v471 = vld [vmem:[%s445 + $0x180] sm:$0xff]
                %472 = vst [vmem:[%s446 + $0x60] sm:$0xff] %v471
                %v473 = vld [vmem:[%s445 + $0x188] sm:$0xff]
                %474 = vst [vmem:[%s446 + $0x68] sm:$0xff] %v473
                %v475 = vld [vmem:[%s445 + $0x190] sm:$0xff]
                %476 = vst [vmem:[%s446 + $0x70] sm:$0xff] %v475
                %v477 = vld [vmem:[%s445 + $0x198] sm:$0xff]
                %478 = vst [vmem:[%s446 + $0x78] sm:$0xff] %v477
              $region68: #{convlstm_cell_forward.1} parent=62 // loop_footer
                %s444 = sadd.s32 1, %s440
              $region69: #{convlstm_cell_forward.1} parent=62 // loop_footer_branch
                %439 = sbr.rel target = $region65
              $region70: #{convlstm_cell_forward.1} parent=62 // loop_exit
                _
            $region63: #{convlstm_cell_forward.1} parent=58 // pred_fallthru
              _
            // Predicated region
            $region71: #{convlstm_cell_forward.1} parent=58 // pred_check
              _
            $region72: #{convlstm_cell_forward.1} parent=58 // pred_check_branch
              %480 = sbr.rel target = $region74
            $region73: #{convlstm_cell_forward.1} parent=58 // pred_region
              _
            $region74: #{convlstm_cell_forward.1} parent=58 // pred_fallthru
              _
          $region59: #{convlstm_cell_forward.1} parent=54 // pred_fallthru
            _
          %481 = vnop
        $region55: #{convlstm_cell_forward.1} parent=27 // pred_fallthru
          _
      $region28: #{convlstm_cell_forward.1} parent=5 // pred_fallthru
        _
      %p482 = scmp.le.s32.totalorder 1, %s13
      %p483 = scmp.lt.s32.totalorder %s13, 5
      %p484 = pnand %p482, %p483
      %p485 = pneg %p484
      // Predicated region
      $region75: #{convlstm_cell_forward.1} parent=5 // pred_check
        _
      $region76: #{convlstm_cell_forward.1} parent=5 // pred_check_branch
        %487 = sbr.rel (%p484) target = $region78
      $region77: #{convlstm_cell_forward.1} parent=5 // pred_region
        %s488 = ssub.s32 %s13, 1
        %s489 = sand.u32 %s26, 1
        %s490 = sand.u32 %s26, 1
        %s491 = smul.addr %s490, 768
        %s492 = scalar_lea.vmem [#allocation2], %s491
        // Predicated region
        $region79: #{convlstm_cell_forward.1} parent=77 // pred_check
          %p493 = pneg %p39
        $region80: #{convlstm_cell_forward.1} parent=77 // pred_check_branch
          %495 = sbr.rel (%p493) target = $region82
        $region81: #{convlstm_cell_forward.1} parent=77 // pred_region
          _
        $region82: #{convlstm_cell_forward.1} parent=77 // pred_fallthru
          _
        %s496 = sand.u32 %s52, 1
        %s497 = sand.u32 %s52, 1
        %s498 = smul.addr %s497, 128
        %s499 = scalar_lea.vmem [#allocation3], %s498
        // Predicated region
        $region83: #{convlstm_cell_forward.1} parent=77 // pred_check
          %p500 = pneg %p65
        $region84: #{convlstm_cell_forward.1} parent=77 // pred_check_branch
          %502 = sbr.rel (%p500) target = $region86
        $region85: #{convlstm_cell_forward.1} parent=77 // pred_region
          _
        $region86: #{convlstm_cell_forward.1} parent=77 // pred_fallthru
          _
        %s503 = sand.u32 %s26, 1
        %s504 = sand.u32 %s26, 1
        %s505 = smul.addr %s504, 768
        %s506 = scalar_lea.vmem [#allocation2], %s505
        %p507 = pneg %p39
        %p508 = pneg %p36
        %s509 = sand.u32 %s52, 1
        %s510 = sand.u32 %s52, 1
        %s511 = smul.addr %s510, 128
        %s512 = scalar_lea.vmem [#allocation3], %s511
        %p513 = pneg %p65
        %p514 = pneg %p62
        %p515 = pneg %p86
        %p516 = pneg %p83
        %p517 = pneg %p107
        %p518 = pneg %p104
        %p519 = pneg %p128
        %p520 = pneg %p125
        %p521 = pneg %p154
        %p522 = pneg %p151
        %s523 = sand.u32 %s141, 1
        %s524 = sand.u32 %s141, 1
        %s525 = smul.addr %s524, 128
        %s526 = scalar_lea.vmem [#allocation4], %s525
        %p527 = pneg %p180
        %p528 = pneg %p177
        %s529 = sand.u32 %s167, 1
        %s530 = sand.u32 %s167, 1
        %s531 = smul.addr %s530, 128
        %s532 = scalar_lea.vmem [#allocation5], %s531
        %s533 = smul.u32 4, %s18
        %s534 = smul.u32 4, %s18
        %s535 = smul.u32 4, %s18
        %s536 = smul.u32 4, %s18
        %v538 = vld [vmem:[%s2] sm:$0xff]
        %v539 = vld [vmem:[%s2 + $0x8] sm:$0xf]
        %v540 = vld [vmem:[%s2 + $0xc] sm:$0xff]
        %v541 = vld [vmem:[%s2 + $0x14] sm:$0xf]
        %v542 = vld [vmem:[%s2 + $0x18] sm:$0xff]
        %v543 = vld [vmem:[%s2 + $0x20] sm:$0xf]
        %v544 = vld [vmem:[%s2 + $0x24] sm:$0xff]
        %v545 = vld [vmem:[%s2 + $0x2c] sm:$0xf]
        %v546 = vld [vmem:[%s2 + $0x30] sm:$0xff]
        %v547 = vld [vmem:[%s2 + $0x38] sm:$0xf]
        %v548 = vld [vmem:[%s2 + $0x3c] sm:$0xff]
        %v549 = vld [vmem:[%s2 + $0x44] sm:$0xf]
        %v550 = vld [vmem:[%s2 + $0x48] sm:$0xff]
        %v551 = vld [vmem:[%s2 + $0x50] sm:$0xf]
        %v552 = vld [vmem:[%s2 + $0x54] sm:$0xff]
        %v553 = vld [vmem:[%s2 + $0x5c] sm:$0xf]
        %v554 = vld [vmem:[%s2 + $0x60] sm:$0xff]
        %v555 = vld [vmem:[%s2 + $0x68] sm:$0xf]
        %v556 = vld [vmem:[%s2 + $0x6c] sm:$0xff]
        %v557 = vld [vmem:[%s2 + $0x74] sm:$0xf]
        %v558 = vld [vmem:[%s2 + $0x78] sm:$0xff]
        %v559 = vld [vmem:[%s2 + $0x80] sm:$0xf]
        %v560 = vld [vmem:[%s2 + $0x84] sm:$0xff]
        %v561 = vld [vmem:[%s2 + $0x8c] sm:$0xf]
        %v562 = vld [vmem:[%s2 + $0x90] sm:$0xff]
        %v563 = vld [vmem:[%s2 + $0x98] sm:$0xf]
        %v564 = vld [vmem:[%s2 + $0x9c] sm:$0xff]
        %v565 = vld [vmem:[%s2 + $0xa4] sm:$0xf]
        %v566 = vld [vmem:[%s2 + $0xa8] sm:$0xff]
        %v567 = vld [vmem:[%s2 + $0xb0] sm:$0xf]
        %v568 = vld [vmem:[%s2 + $0xb4] sm:$0xff]
        %v569 = vld [vmem:[%s2 + $0xbc] sm:$0xf]
        %v570 = vld [vmem:[%s492] sm:$0xff]
        %v571 = vld [vmem:[%s492 + $0x8] sm:$0xff]
        %v572 = vld [vmem:[%s492 + $0x10] sm:$0xff]
        %v573 = vld [vmem:[%s492 + $0x18] sm:$0xff]
        %v574 = vld [vmem:[%s492 + $0x20] sm:$0xff]
        %v575 = vld [vmem:[%s492 + $0x28] sm:$0xff]
        %v576 = vld [vmem:[%s492 + $0x30] sm:$0xff]
        %v577 = vld [vmem:[%s492 + $0x38] sm:$0xff]
        %v578 = vld [vmem:[%s492 + $0x40] sm:$0xff]
        %v579 = vld [vmem:[%s492 + $0x48] sm:$0xff]
        %v580 = vld [vmem:[%s492 + $0x50] sm:$0xff]
        %v581 = vld [vmem:[%s492 + $0x58] sm:$0xff]
        %v582 = vld [vmem:[%s492 + $0x60] sm:$0xff]
        %v583 = vld [vmem:[%s492 + $0x68] sm:$0xff]
        %v584 = vld [vmem:[%s492 + $0x70] sm:$0xff]
        %v585 = vld [vmem:[%s492 + $0x78] sm:$0xff]
        %v586 = vld [vmem:[%s492 + $0x80] sm:$0xff]
        %v587 = vld [vmem:[%s492 + $0x88] sm:$0xff]
        %v588 = vld [vmem:[%s492 + $0x90] sm:$0xff]
        %v589 = vld [vmem:[%s492 + $0x98] sm:$0xff]
        %v590 = vld [vmem:[%s492 + $0xa0] sm:$0xff]
        %v591 = vld [vmem:[%s492 + $0xa8] sm:$0xff]
        %v592 = vld [vmem:[%s492 + $0xb0] sm:$0xff]
        %v593 = vld [vmem:[%s492 + $0xb8] sm:$0xff]
        %v594 = vld [vmem:[%s492 + $0xc0] sm:$0xff]
        %v595 = vld [vmem:[%s492 + $0xc8] sm:$0xff]
        %v596 = vld [vmem:[%s492 + $0xd0] sm:$0xff]
        %v597 = vld [vmem:[%s492 + $0xd8] sm:$0xff]
        %v598 = vld [vmem:[%s492 + $0xe0] sm:$0xff]
        %v599 = vld [vmem:[%s492 + $0xe8] sm:$0xff]
        %v600 = vld [vmem:[%s492 + $0xf0] sm:$0xff]
        %v601 = vld [vmem:[%s492 + $0xf8] sm:$0xff]
        %v602 = vld [vmem:[%s492 + $0x100] sm:$0xff]
        %v603 = vld [vmem:[%s492 + $0x108] sm:$0xff]
        %v604 = vld [vmem:[%s492 + $0x110] sm:$0xff]
        %v605 = vld [vmem:[%s492 + $0x118] sm:$0xff]
        %v606 = vld [vmem:[%s492 + $0x120] sm:$0xff]
        %v607 = vld [vmem:[%s492 + $0x128] sm:$0xff]
        %v608 = vld [vmem:[%s492 + $0x130] sm:$0xff]
        %v609 = vld [vmem:[%s492 + $0x138] sm:$0xff]
        %v610 = vld [vmem:[%s492 + $0x140] sm:$0xff]
        %v611 = vld [vmem:[%s492 + $0x148] sm:$0xff]
        %v612 = vld [vmem:[%s492 + $0x150] sm:$0xff]
        %v613 = vld [vmem:[%s492 + $0x158] sm:$0xff]
        %v614 = vld [vmem:[%s492 + $0x160] sm:$0xff]
        %v615 = vld [vmem:[%s492 + $0x168] sm:$0xff]
        %v616 = vld [vmem:[%s492 + $0x170] sm:$0xff]
        %v617 = vld [vmem:[%s492 + $0x178] sm:$0xff]
        %v618 = vld [vmem:[%s492 + $0x180] sm:$0xff]
        %v619 = vld [vmem:[%s492 + $0x188] sm:$0xff]
        %v620 = vld [vmem:[%s492 + $0x190] sm:$0xff]
        %v621 = vld [vmem:[%s492 + $0x198] sm:$0xff]
        %v622 = vld [vmem:[%s492 + $0x1a0] sm:$0xff]
        %v623 = vld [vmem:[%s492 + $0x1a8] sm:$0xff]
        %v624 = vld [vmem:[%s492 + $0x1b0] sm:$0xff]
        %v625 = vld [vmem:[%s492 + $0x1b8] sm:$0xff]
        %v626 = vld [vmem:[%s492 + $0x1c0] sm:$0xff]
        %v627 = vld [vmem:[%s492 + $0x1c8] sm:$0xff]
        %v628 = vld [vmem:[%s492 + $0x1d0] sm:$0xff]
        %v629 = vld [vmem:[%s492 + $0x1d8] sm:$0xff]
        %v630 = vld [vmem:[%s492 + $0x1e0] sm:$0xff]
        %v631 = vld [vmem:[%s492 + $0x1e8] sm:$0xff]
        %v632 = vld [vmem:[%s492 + $0x1f0] sm:$0xff]
        %v633 = vld [vmem:[%s492 + $0x1f8] sm:$0xff]
        %v634 = vld [vmem:[%s492 + $0x200] sm:$0xff]
        %v635 = vld [vmem:[%s492 + $0x208] sm:$0xff]
        %v636 = vld [vmem:[%s492 + $0x210] sm:$0xff]
        %v637 = vld [vmem:[%s492 + $0x218] sm:$0xff]
        %v638 = vld [vmem:[%s492 + $0x220] sm:$0xff]
        %v639 = vld [vmem:[%s492 + $0x228] sm:$0xff]
        %v640 = vld [vmem:[%s492 + $0x230] sm:$0xff]
        %v641 = vld [vmem:[%s492 + $0x238] sm:$0xff]
        %v642 = vld [vmem:[%s492 + $0x240] sm:$0xff]
        %v643 = vld [vmem:[%s492 + $0x248] sm:$0xff]
        %v644 = vld [vmem:[%s492 + $0x250] sm:$0xff]
        %v645 = vld [vmem:[%s492 + $0x258] sm:$0xff]
        %v646 = vld [vmem:[%s492 + $0x260] sm:$0xff]
        %v647 = vld [vmem:[%s492 + $0x268] sm:$0xff]
        %v648 = vld [vmem:[%s492 + $0x270] sm:$0xff]
        %v649 = vld [vmem:[%s492 + $0x278] sm:$0xff]
        %v650 = vld [vmem:[%s492 + $0x280] sm:$0xff]
        %v651 = vld [vmem:[%s492 + $0x288] sm:$0xff]
        %v652 = vld [vmem:[%s492 + $0x290] sm:$0xff]
        %v653 = vld [vmem:[%s492 + $0x298] sm:$0xff]
        %v654 = vld [vmem:[%s492 + $0x2a0] sm:$0xff]
        %v655 = vld [vmem:[%s492 + $0x2a8] sm:$0xff]
        %v656 = vld [vmem:[%s492 + $0x2b0] sm:$0xff]
        %v657 = vld [vmem:[%s492 + $0x2b8] sm:$0xff]
        %v658 = vld [vmem:[%s492 + $0x2c0] sm:$0xff]
        %v659 = vld [vmem:[%s492 + $0x2c8] sm:$0xff]
        %v660 = vld [vmem:[%s492 + $0x2d0] sm:$0xff]
        %v661 = vld [vmem:[%s492 + $0x2d8] sm:$0xff]
        %v662 = vld [vmem:[%s492 + $0x2e0] sm:$0xff]
        %v663 = vld [vmem:[%s492 + $0x2e8] sm:$0xff]
        %v664 = vld [vmem:[%s492 + $0x2f0] sm:$0xff]
        %v665 = vld [vmem:[%s492 + $0x2f8] sm:$0xff]
        %v666 = vld [vmem:[%s3] sm:$0xff]
        %v667 = vld [vmem:[%s3 + $0x8] sm:$0xff]
        %v668 = vld [vmem:[%s3 + $0x10] sm:$0xff]
        %v669 = vld [vmem:[%s3 + $0x18] sm:$0xff]
        %v670 = vld [vmem:[%s3 + $0x20] sm:$0xff]
        %v671 = vld [vmem:[%s3 + $0x28] sm:$0xff]
        %v672 = vld [vmem:[%s3 + $0x30] sm:$0xff]
        %v673 = vld [vmem:[%s3 + $0x38] sm:$0xff]
        %v674 = vld [vmem:[%s3 + $0x40] sm:$0xff]
        %v675 = vld [vmem:[%s3 + $0x48] sm:$0xff]
        %v676 = vld [vmem:[%s3 + $0x50] sm:$0xff]
        %v677 = vld [vmem:[%s3 + $0x58] sm:$0xff]
        %v678 = vld [vmem:[%s3 + $0x60] sm:$0xff]
        %v679 = vld [vmem:[%s3 + $0x68] sm:$0xff]
        %v680 = vld [vmem:[%s3 + $0x70] sm:$0xff]
        %v681 = vld [vmem:[%s3 + $0x78] sm:$0xff]
        %683 = vset.pattern.permute.xlu0 0
        %684 = vperm.xlu0 %683, %v666
        %v685 = vpop.permute.xlu0 %684
        %688 = vset.pattern.permute.xlu0 0
        %689 = vperm.xlu0 %688, %v667
        %v690 = vpop.permute.xlu0 %689
        %693 = vset.pattern.permute.xlu0 0
        %694 = vperm.xlu0 %693, %v668
        %v695 = vpop.permute.xlu0 %694
        %698 = vset.pattern.permute.xlu0 0
        %699 = vperm.xlu0 %698, %v669
        %v700 = vpop.permute.xlu0 %699
        %703 = vset.pattern.permute.xlu0 0
        %704 = vperm.xlu0 %703, %v670
        %v705 = vpop.permute.xlu0 %704
        %708 = vset.pattern.permute.xlu0 0
        %709 = vperm.xlu0 %708, %v671
        %v710 = vpop.permute.xlu0 %709
        %713 = vset.pattern.permute.xlu0 0
        %714 = vperm.xlu0 %713, %v672
        %v715 = vpop.permute.xlu0 %714
        %718 = vset.pattern.permute.xlu0 0
        %719 = vperm.xlu0 %718, %v673
        %v720 = vpop.permute.xlu0 %719
        %723 = vset.pattern.permute.xlu0 0
        %724 = vperm.xlu0 %723, %v674
        %v725 = vpop.permute.xlu0 %724
        %728 = vset.pattern.permute.xlu0 0
        %729 = vperm.xlu0 %728, %v675
        %v730 = vpop.permute.xlu0 %729
        %733 = vset.pattern.permute.xlu0 0
        %734 = vperm.xlu0 %733, %v676
        %v735 = vpop.permute.xlu0 %734
        %738 = vset.pattern.permute.xlu0 0
        %739 = vperm.xlu0 %738, %v677
        %v740 = vpop.permute.xlu0 %739
        %743 = vset.pattern.permute.xlu0 0
        %744 = vperm.xlu0 %743, %v678
        %v745 = vpop.permute.xlu0 %744
        %748 = vset.pattern.permute.xlu0 0
        %749 = vperm.xlu0 %748, %v679
        %v750 = vpop.permute.xlu0 %749
        %753 = vset.pattern.permute.xlu0 0
        %754 = vperm.xlu0 %753, %v680
        %v755 = vpop.permute.xlu0 %754
        %758 = vset.pattern.permute.xlu0 0
        %759 = vperm.xlu0 %758, %v681
        %v760 = vpop.permute.xlu0 %759
        %v794 = vunpack.c.l.b16 %v538
        %v795 = vunpack.c.h.b16 %v538
        %v796 = vunpack.c.l.b16 %v539
        %v797 = vunpack.c.l.b16 %v540
        %v798 = vunpack.c.h.b16 %v540
        %v799 = vunpack.c.l.b16 %v541
        %v800 = vunpack.c.l.b16 %v542
        %v801 = vunpack.c.h.b16 %v542
        %v802 = vunpack.c.l.b16 %v543
        %v803 = vunpack.c.l.b16 %v544
        %v804 = vunpack.c.h.b16 %v544
        %v805 = vunpack.c.l.b16 %v545
        %v806 = vunpack.c.l.b16 %v546
        %v807 = vunpack.c.h.b16 %v546
        %v808 = vunpack.c.l.b16 %v547
        %v809 = vunpack.c.l.b16 %v548
        %v810 = vunpack.c.h.b16 %v548
        %v811 = vunpack.c.l.b16 %v549
        %v812 = vunpack.c.l.b16 %v550
        %v813 = vunpack.c.h.b16 %v550
        %v814 = vunpack.c.l.b16 %v551
        %v815 = vunpack.c.l.b16 %v552
        %v816 = vunpack.c.h.b16 %v552
        %v817 = vunpack.c.l.b16 %v553
        %v818 = vunpack.c.l.b16 %v554
        %v819 = vunpack.c.h.b16 %v554
        %v820 = vunpack.c.l.b16 %v555
        %v821 = vunpack.c.l.b16 %v556
        %v822 = vunpack.c.h.b16 %v556
        %v823 = vunpack.c.l.b16 %v557
        %v824 = vunpack.c.l.b16 %v558
        %v825 = vunpack.c.h.b16 %v558
        %v826 = vunpack.c.l.b16 %v559
        %v827 = vunpack.c.l.b16 %v560
        %v828 = vunpack.c.h.b16 %v560
        %v829 = vunpack.c.l.b16 %v561
        %v830 = vunpack.c.l.b16 %v562
        %v831 = vunpack.c.h.b16 %v562
        %v832 = vunpack.c.l.b16 %v563
        %v833 = vunpack.c.l.b16 %v564
        %v834 = vunpack.c.h.b16 %v564
        %v835 = vunpack.c.l.b16 %v565
        %v836 = vunpack.c.l.b16 %v566
        %v837 = vunpack.c.h.b16 %v566
        %v838 = vunpack.c.l.b16 %v567
        %v839 = vunpack.c.l.b16 %v568
        %v840 = vunpack.c.h.b16 %v568
        %v841 = vunpack.c.l.b16 %v569
        %v842 = vpack.c.b16 %v797, %v794
        %v843 = vpack.c.b16 %v798, %v795
        %v844 = vpack.c.b16 %v799, %v796
        %v845 = vpack.c.b16 %v803, %v800
        %v846 = vpack.c.b16 %v804, %v801
        %v847 = vpack.c.b16 %v805, %v802
        %v848 = vpack.c.b16 %v809, %v806
        %v849 = vpack.c.b16 %v810, %v807
        %v850 = vpack.c.b16 %v811, %v808
        %v851 = vpack.c.b16 %v815, %v812
        %v852 = vpack.c.b16 %v816, %v813
        %v853 = vpack.c.b16 %v817, %v814
        %v854 = vpack.c.b16 %v821, %v818
        %v855 = vpack.c.b16 %v822, %v819
        %v856 = vpack.c.b16 %v823, %v820
        %v857 = vpack.c.b16 %v827, %v824
        %v858 = vpack.c.b16 %v828, %v825
        %v859 = vpack.c.b16 %v829, %v826
        %v860 = vpack.c.b16 %v833, %v830
        %v861 = vpack.c.b16 %v834, %v831
        %v862 = vpack.c.b16 %v835, %v832
        %v863 = vpack.c.b16 %v839, %v836
        %v864 = vpack.c.b16 %v840, %v837
        %v865 = vpack.c.b16 %v841, %v838
        %v986 = vunpack.c.l.b16 %v570
        %v987 = vunpack.c.h.b16 %v570
        %v988 = vunpack.c.l.b16 %v571
        %v989 = vunpack.c.h.b16 %v571
        %v990 = vunpack.c.l.b16 %v572
        %v991 = vunpack.c.h.b16 %v572
        %v992 = vunpack.c.l.b16 %v573
        %v993 = vunpack.c.h.b16 %v573
        %v994 = vunpack.c.l.b16 %v574
        %v995 = vunpack.c.h.b16 %v574
        %v996 = vunpack.c.l.b16 %v575
        %v997 = vunpack.c.h.b16 %v575
        %v998 = vunpack.c.l.b16 %v576
        %v999 = vunpack.c.h.b16 %v576
        %v1000 = vunpack.c.l.b16 %v577
        %v1001 = vunpack.c.h.b16 %v577
        %v1002 = vunpack.c.l.b16 %v578
        %v1003 = vunpack.c.h.b16 %v578
        %v1004 = vunpack.c.l.b16 %v579
        %v1005 = vunpack.c.h.b16 %v579
        %v1006 = vunpack.c.l.b16 %v580
        %v1007 = vunpack.c.h.b16 %v580
        %v1008 = vunpack.c.l.b16 %v581
        %v1009 = vunpack.c.h.b16 %v581
        %v1010 = vunpack.c.l.b16 %v582
        %v1011 = vunpack.c.h.b16 %v582
        %v1012 = vunpack.c.l.b16 %v583
        %v1013 = vunpack.c.h.b16 %v583
        %v1014 = vunpack.c.l.b16 %v584
        %v1015 = vunpack.c.h.b16 %v584
        %v1016 = vunpack.c.l.b16 %v585
        %v1017 = vunpack.c.h.b16 %v585
        %v1018 = vunpack.c.l.b16 %v586
        %v1019 = vunpack.c.h.b16 %v586
        %v1020 = vunpack.c.l.b16 %v587
        %v1021 = vunpack.c.h.b16 %v587
        %v1022 = vunpack.c.l.b16 %v588
        %v1023 = vunpack.c.h.b16 %v588
        %v1024 = vunpack.c.l.b16 %v589
        %v1025 = vunpack.c.h.b16 %v589
        %v1026 = vunpack.c.l.b16 %v590
        %v1027 = vunpack.c.h.b16 %v590
        %v1028 = vunpack.c.l.b16 %v591
        %v1029 = vunpack.c.h.b16 %v591
        %v1030 = vunpack.c.l.b16 %v592
        %v1031 = vunpack.c.h.b16 %v592
        %v1032 = vunpack.c.l.b16 %v593
        %v1033 = vunpack.c.h.b16 %v593
        %v1034 = vunpack.c.l.b16 %v594
        %v1035 = vunpack.c.h.b16 %v594
        %v1036 = vunpack.c.l.b16 %v595
        %v1037 = vunpack.c.h.b16 %v595
        %v1038 = vunpack.c.l.b16 %v596
        %v1039 = vunpack.c.h.b16 %v596
        %v1040 = vunpack.c.l.b16 %v597
        %v1041 = vunpack.c.h.b16 %v597
        %v1042 = vunpack.c.l.b16 %v598
        %v1043 = vunpack.c.h.b16 %v598
        %v1044 = vunpack.c.l.b16 %v599
        %v1045 = vunpack.c.h.b16 %v599
        %v1046 = vunpack.c.l.b16 %v600
        %v1047 = vunpack.c.h.b16 %v600
        %v1048 = vunpack.c.l.b16 %v601
        %v1049 = vunpack.c.h.b16 %v601
        %v1050 = vunpack.c.l.b16 %v602
        %v1051 = vunpack.c.h.b16 %v602
        %v1052 = vunpack.c.l.b16 %v603
        %v1053 = vunpack.c.h.b16 %v603
        %v1054 = vunpack.c.l.b16 %v604
        %v1055 = vunpack.c.h.b16 %v604
        %v1056 = vunpack.c.l.b16 %v605
        %v1057 = vunpack.c.h.b16 %v605
        %v1058 = vunpack.c.l.b16 %v606
        %v1059 = vunpack.c.h.b16 %v606
        %v1060 = vunpack.c.l.b16 %v607
        %v1061 = vunpack.c.h.b16 %v607
        %v1062 = vunpack.c.l.b16 %v608
        %v1063 = vunpack.c.h.b16 %v608
        %v1064 = vunpack.c.l.b16 %v609
        %v1065 = vunpack.c.h.b16 %v609
        %v1066 = vunpack.c.l.b16 %v610
        %v1067 = vunpack.c.h.b16 %v610
        %v1068 = vunpack.c.l.b16 %v611
        %v1069 = vunpack.c.h.b16 %v611
        %v1070 = vunpack.c.l.b16 %v612
        %v1071 = vunpack.c.h.b16 %v612
        %v1072 = vunpack.c.l.b16 %v613
        %v1073 = vunpack.c.h.b16 %v613
        %v1074 = vunpack.c.l.b16 %v614
        %v1075 = vunpack.c.h.b16 %v614
        %v1076 = vunpack.c.l.b16 %v615
        %v1077 = vunpack.c.h.b16 %v615
        %v1078 = vunpack.c.l.b16 %v616
        %v1079 = vunpack.c.h.b16 %v616
        %v1080 = vunpack.c.l.b16 %v617
        %v1081 = vunpack.c.h.b16 %v617
        %v1082 = vunpack.c.l.b16 %v618
        %v1083 = vunpack.c.h.b16 %v618
        %v1084 = vunpack.c.l.b16 %v619
        %v1085 = vunpack.c.h.b16 %v619
        %v1086 = vunpack.c.l.b16 %v620
        %v1087 = vunpack.c.h.b16 %v620
        %v1088 = vunpack.c.l.b16 %v621
        %v1089 = vunpack.c.h.b16 %v621
        %v1090 = vunpack.c.l.b16 %v622
        %v1091 = vunpack.c.h.b16 %v622
        %v1092 = vunpack.c.l.b16 %v623
        %v1093 = vunpack.c.h.b16 %v623
        %v1094 = vunpack.c.l.b16 %v624
        %v1095 = vunpack.c.h.b16 %v624
        %v1096 = vunpack.c.l.b16 %v625
        %v1097 = vunpack.c.h.b16 %v625
        %v1098 = vunpack.c.l.b16 %v626
        %v1099 = vunpack.c.h.b16 %v626
        %v1100 = vunpack.c.l.b16 %v627
        %v1101 = vunpack.c.h.b16 %v627
        %v1102 = vunpack.c.l.b16 %v628
        %v1103 = vunpack.c.h.b16 %v628
        %v1104 = vunpack.c.l.b16 %v629
        %v1105 = vunpack.c.h.b16 %v629
        %v1106 = vunpack.c.l.b16 %v630
        %v1107 = vunpack.c.h.b16 %v630
        %v1108 = vunpack.c.l.b16 %v631
        %v1109 = vunpack.c.h.b16 %v631
        %v1110 = vunpack.c.l.b16 %v632
        %v1111 = vunpack.c.h.b16 %v632
        %v1112 = vunpack.c.l.b16 %v633
        %v1113 = vunpack.c.h.b16 %v633
        %v1114 = vunpack.c.l.b16 %v634
        %v1115 = vunpack.c.h.b16 %v634
        %v1116 = vunpack.c.l.b16 %v635
        %v1117 = vunpack.c.h.b16 %v635
        %v1118 = vunpack.c.l.b16 %v636
        %v1119 = vunpack.c.h.b16 %v636
        %v1120 = vunpack.c.l.b16 %v637
        %v1121 = vunpack.c.h.b16 %v637
        %v1122 = vunpack.c.l.b16 %v638
        %v1123 = vunpack.c.h.b16 %v638
        %v1124 = vunpack.c.l.b16 %v639
        %v1125 = vunpack.c.h.b16 %v639
        %v1126 = vunpack.c.l.b16 %v640
        %v1127 = vunpack.c.h.b16 %v640
        %v1128 = vunpack.c.l.b16 %v641
        %v1129 = vunpack.c.h.b16 %v641
        %v1130 = vunpack.c.l.b16 %v642
        %v1131 = vunpack.c.h.b16 %v642
        %v1132 = vunpack.c.l.b16 %v643
        %v1133 = vunpack.c.h.b16 %v643
        %v1134 = vunpack.c.l.b16 %v644
        %v1135 = vunpack.c.h.b16 %v644
        %v1136 = vunpack.c.l.b16 %v645
        %v1137 = vunpack.c.h.b16 %v645
        %v1138 = vunpack.c.l.b16 %v646
        %v1139 = vunpack.c.h.b16 %v646
        %v1140 = vunpack.c.l.b16 %v647
        %v1141 = vunpack.c.h.b16 %v647
        %v1142 = vunpack.c.l.b16 %v648
        %v1143 = vunpack.c.h.b16 %v648
        %v1144 = vunpack.c.l.b16 %v649
        %v1145 = vunpack.c.h.b16 %v649
        %v1146 = vunpack.c.l.b16 %v650
        %v1147 = vunpack.c.h.b16 %v650
        %v1148 = vunpack.c.l.b16 %v651
        %v1149 = vunpack.c.h.b16 %v651
        %v1150 = vunpack.c.l.b16 %v652
        %v1151 = vunpack.c.h.b16 %v652
        %v1152 = vunpack.c.l.b16 %v653
        %v1153 = vunpack.c.h.b16 %v653
        %v1154 = vunpack.c.l.b16 %v654
        %v1155 = vunpack.c.h.b16 %v654
        %v1156 = vunpack.c.l.b16 %v655
        %v1157 = vunpack.c.h.b16 %v655
        %v1158 = vunpack.c.l.b16 %v656
        %v1159 = vunpack.c.h.b16 %v656
        %v1160 = vunpack.c.l.b16 %v657
        %v1161 = vunpack.c.h.b16 %v657
        %v1162 = vunpack.c.l.b16 %v658
        %v1163 = vunpack.c.h.b16 %v658
        %v1164 = vunpack.c.l.b16 %v659
        %v1165 = vunpack.c.h.b16 %v659
        %v1166 = vunpack.c.l.b16 %v660
        %v1167 = vunpack.c.h.b16 %v660
        %v1168 = vunpack.c.l.b16 %v661
        %v1169 = vunpack.c.h.b16 %v661
        %v1170 = vunpack.c.l.b16 %v662
        %v1171 = vunpack.c.h.b16 %v662
        %v1172 = vunpack.c.l.b16 %v663
        %v1173 = vunpack.c.h.b16 %v663
        %v1174 = vunpack.c.l.b16 %v664
        %v1175 = vunpack.c.h.b16 %v664
        %v1176 = vunpack.c.l.b16 %v665
        %v1177 = vunpack.c.h.b16 %v665
        %v1178 = vpack.c.b16 %v990, %v986
        %v1179 = vpack.c.b16 %v991, %v987
        %v1180 = vpack.c.b16 %v992, %v988
        %v1181 = vpack.c.b16 %v993, %v989
        %v1182 = vpack.c.b16 %v998, %v994
        %v1183 = vpack.c.b16 %v999, %v995
        %v1184 = vpack.c.b16 %v1000, %v996
        %v1185 = vpack.c.b16 %v1001, %v997
        %v1186 = vpack.c.b16 %v1006, %v1002
        %v1187 = vpack.c.b16 %v1007, %v1003
        %v1188 = vpack.c.b16 %v1008, %v1004
        %v1189 = vpack.c.b16 %v1009, %v1005
        %v1190 = vpack.c.b16 %v1014, %v1010
        %v1191 = vpack.c.b16 %v1015, %v1011
        %v1192 = vpack.c.b16 %v1016, %v1012
        %v1193 = vpack.c.b16 %v1017, %v1013
        %v1194 = vpack.c.b16 %v1022, %v1018
        %v1195 = vpack.c.b16 %v1023, %v1019
        %v1196 = vpack.c.b16 %v1024, %v1020
        %v1197 = vpack.c.b16 %v1025, %v1021
        %v1198 = vpack.c.b16 %v1030, %v1026
        %v1199 = vpack.c.b16 %v1031, %v1027
        %v1200 = vpack.c.b16 %v1032, %v1028
        %v1201 = vpack.c.b16 %v1033, %v1029
        %v1202 = vpack.c.b16 %v1038, %v1034
        %v1203 = vpack.c.b16 %v1039, %v1035
        %v1204 = vpack.c.b16 %v1040, %v1036
        %v1205 = vpack.c.b16 %v1041, %v1037
        %v1206 = vpack.c.b16 %v1046, %v1042
        %v1207 = vpack.c.b16 %v1047, %v1043
        %v1208 = vpack.c.b16 %v1048, %v1044
        %v1209 = vpack.c.b16 %v1049, %v1045
        %v1210 = vpack.c.b16 %v1054, %v1050
        %v1211 = vpack.c.b16 %v1055, %v1051
        %v1212 = vpack.c.b16 %v1056, %v1052
        %v1213 = vpack.c.b16 %v1057, %v1053
        %v1214 = vpack.c.b16 %v1062, %v1058
        %v1215 = vpack.c.b16 %v1063, %v1059
        %v1216 = vpack.c.b16 %v1064, %v1060
        %v1217 = vpack.c.b16 %v1065, %v1061
        %v1218 = vpack.c.b16 %v1070, %v1066
        %v1219 = vpack.c.b16 %v1071, %v1067
        %v1220 = vpack.c.b16 %v1072, %v1068
        %v1221 = vpack.c.b16 %v1073, %v1069
        %v1222 = vpack.c.b16 %v1078, %v1074
        %v1223 = vpack.c.b16 %v1079, %v1075
        %v1224 = vpack.c.b16 %v1080, %v1076
        %v1225 = vpack.c.b16 %v1081, %v1077
        %v1226 = vpack.c.b16 %v1086, %v1082
        %v1227 = vpack.c.b16 %v1087, %v1083
        %v1228 = vpack.c.b16 %v1088, %v1084
        %v1229 = vpack.c.b16 %v1089, %v1085
        %v1230 = vpack.c.b16 %v1094, %v1090
        %v1231 = vpack.c.b16 %v1095, %v1091
        %v1232 = vpack.c.b16 %v1096, %v1092
        %v1233 = vpack.c.b16 %v1097, %v1093
        %v1234 = vpack.c.b16 %v1102, %v1098
        %v1235 = vpack.c.b16 %v1103, %v1099
        %v1236 = vpack.c.b16 %v1104, %v1100
        %v1237 = vpack.c.b16 %v1105, %v1101
        %v1238 = vpack.c.b16 %v1110, %v1106
        %v1239 = vpack.c.b16 %v1111, %v1107
        %v1240 = vpack.c.b16 %v1112, %v1108
        %v1241 = vpack.c.b16 %v1113, %v1109
        %v1242 = vpack.c.b16 %v1118, %v1114
        %v1243 = vpack.c.b16 %v1119, %v1115
        %v1244 = vpack.c.b16 %v1120, %v1116
        %v1245 = vpack.c.b16 %v1121, %v1117
        %v1246 = vpack.c.b16 %v1126, %v1122
        %v1247 = vpack.c.b16 %v1127, %v1123
        %v1248 = vpack.c.b16 %v1128, %v1124
        %v1249 = vpack.c.b16 %v1129, %v1125
        %v1250 = vpack.c.b16 %v1134, %v1130
        %v1251 = vpack.c.b16 %v1135, %v1131
        %v1252 = vpack.c.b16 %v1136, %v1132
        %v1253 = vpack.c.b16 %v1137, %v1133
        %v1254 = vpack.c.b16 %v1142, %v1138
        %v1255 = vpack.c.b16 %v1143, %v1139
        %v1256 = vpack.c.b16 %v1144, %v1140
        %v1257 = vpack.c.b16 %v1145, %v1141
        %v1258 = vpack.c.b16 %v1150, %v1146
        %v1259 = vpack.c.b16 %v1151, %v1147
        %v1260 = vpack.c.b16 %v1152, %v1148
        %v1261 = vpack.c.b16 %v1153, %v1149
        %v1262 = vpack.c.b16 %v1158, %v1154
        %v1263 = vpack.c.b16 %v1159, %v1155
        %v1264 = vpack.c.b16 %v1160, %v1156
        %v1265 = vpack.c.b16 %v1161, %v1157
        %v1266 = vpack.c.b16 %v1166, %v1162
        %v1267 = vpack.c.b16 %v1167, %v1163
        %v1268 = vpack.c.b16 %v1168, %v1164
        %v1269 = vpack.c.b16 %v1169, %v1165
        %v1270 = vpack.c.b16 %v1174, %v1170
        %v1271 = vpack.c.b16 %v1175, %v1171
        %v1272 = vpack.c.b16 %v1176, %v1172
        %v1273 = vpack.c.b16 %v1177, %v1173
        %1370 = vmatprep.subr.bf16.mxu0 %v1179
        %1371 = vmatpush1.bf16.msra.mxu0 %v1178
        %1372 = vmatprep.subr.bf16.mxu0 %v1183
        %1373 = vmatpush1.bf16.msra.mxu0 %v1182
        %1374 = vmatprep.subr.bf16.mxu0 %v1187
        %1375 = vmatpush1.bf16.msra.mxu0 %v1186
        %1376 = vmatprep.subr.bf16.mxu0 %v1191
        %1377 = vmatpush1.bf16.msra.mxu0 %v1190
        %1378 = vmatprep.subr.bf16.mxu0 %v1195
        %1379 = vmatpush1.bf16.msra.mxu0 %v1194
        %1380 = vmatprep.subr.bf16.mxu0 %v1199
        %1381 = vmatpush1.bf16.msra.mxu0 %v1198
        %1382 = vmatprep.subr.bf16.mxu0 %v1203
        %1383 = vmatpush1.bf16.msra.mxu0 %v1202
        %1384 = vmatprep.subr.bf16.mxu0 %v1207
        %1385 = vmatpush1.bf16.msra.mxu0 %v1206
        %1386 = vmatprep.subr.bf16.mxu0 %v1211
        %1387 = vmatpush1.bf16.msra.mxu0 %v1210
        %1388 = vmatprep.subr.bf16.mxu0 %v1215
        %1389 = vmatpush1.bf16.msra.mxu0 %v1214
        %1390 = vmatprep.subr.bf16.mxu0 %v1219
        %1391 = vmatpush1.bf16.msra.mxu0 %v1218
        %1392 = vmatprep.subr.bf16.mxu0 %v1223
        %1393 = vmatpush1.bf16.msra.mxu0 %v1222
        %1394 = vmatprep.subr.bf16.mxu0 %v1227
        %1395 = vmatpush1.bf16.msra.mxu0 %v1226
        %1396 = vmatprep.subr.bf16.mxu0 %v1231
        %1397 = vmatpush1.bf16.msra.mxu0 %v1230
        %1398 = vmatprep.subr.bf16.mxu0 %v1235
        %1399 = vmatpush1.bf16.msra.mxu0 %v1234
        %1400 = vmatprep.subr.bf16.mxu0 %v1239
        %1401 = vmatpush1.bf16.msra.mxu0 %v1238
        %1402 = vmatprep.mubr.bf16.mxu0 %v843
        %1403 = vmatmul.mubr.bf16.gmra.mrb[0].mxu0 %v842
        %v1404 = vpop.f32.mrb[0].mxu0
        %v1405 = vadd.f32 %v685, %v1404
        %v1406 = vpop.f32.mrb[0].mxu0
        %v1407 = vadd.f32 %v685, %v1406
        %v1408 = vpop.f32.mrb[0].mxu0
        %v1409 = vadd.f32 %v690, %v1408
        %v1410 = vpop.f32.mrb[0].mxu0
        %v1411 = vadd.f32 %v690, %v1410
        %1412 = vmatprep.mubr.bf16.mxu0 %v846
        %1413 = vmatmul.mubr.bf16.gmra.mrb[0].mxu0 %v845
        %v1414 = vpop.f32.mrb[0].mxu0
        %v1415 = vadd.f32 %v695, %v1414
        %v1416 = vpop.f32.mrb[0].mxu0
        %v1417 = vadd.f32 %v695, %v1416
        %v1418 = vpop.f32.mrb[0].mxu0
        %v1419 = vadd.f32 %v700, %v1418
        %v1420 = vpop.f32.mrb[0].mxu0
        %v1421 = vadd.f32 %v700, %v1420
        %1422 = vmatprep.mubr.bf16.mxu0 %v849
        %1423 = vmatmul.mubr.bf16.gmra.mrb[0].mxu0 %v848
        %v1424 = vpop.f32.mrb[0].mxu0
        %v1425 = vadd.f32 %v705, %v1424
        %v1426 = vpop.f32.mrb[0].mxu0
        %v1427 = vadd.f32 %v705, %v1426
        %v1428 = vpop.f32.mrb[0].mxu0
        %v1429 = vadd.f32 %v710, %v1428
        %v1430 = vpop.f32.mrb[0].mxu0
        %v1431 = vadd.f32 %v710, %v1430
        %1432 = vmatprep.mubr.bf16.mxu0 %v852
        %1433 = vmatmul.mubr.bf16.gmra.mrb[0].mxu0 %v851
        %v1434 = vpop.f32.mrb[0].mxu0
        %v1435 = vadd.f32 %v715, %v1434
        %v1436 = vpop.f32.mrb[0].mxu0
        %v1437 = vadd.f32 %v715, %v1436
        %v1438 = vpop.f32.mrb[0].mxu0
        %v1439 = vadd.f32 %v720, %v1438
        %v1440 = vpop.f32.mrb[0].mxu0
        %v1441 = vadd.f32 %v720, %v1440
        %1442 = vmatprep.mubr.bf16.mxu0 %v855
        %1443 = vmatmul.mubr.bf16.gmra.mrb[0].mxu0 %v854
        %v1444 = vpop.f32.mrb[0].mxu0
        %v1445 = vadd.f32 %v725, %v1444
        %v1446 = vpop.f32.mrb[0].mxu0
        %v1447 = vadd.f32 %v725, %v1446
        %v1448 = vpop.f32.mrb[0].mxu0
        %v1449 = vadd.f32 %v730, %v1448
        %v1450 = vpop.f32.mrb[0].mxu0
        %v1451 = vadd.f32 %v730, %v1450
        %1452 = vmatprep.mubr.bf16.mxu0 %v858
        %1453 = vmatmul.mubr.bf16.gmra.mrb[0].mxu0 %v857
        %v1454 = vpop.f32.mrb[0].mxu0
        %v1455 = vadd.f32 %v735, %v1454
        %v1456 = vpop.f32.mrb[0].mxu0
        %v1457 = vadd.f32 %v735, %v1456
        %v1458 = vpop.f32.mrb[0].mxu0
        %v1459 = vadd.f32 %v740, %v1458
        %v1460 = vpop.f32.mrb[0].mxu0
        %v1461 = vadd.f32 %v740, %v1460
        %1462 = vmatprep.mubr.bf16.mxu0 %v861
        %1463 = vmatmul.mubr.bf16.gmra.mrb[0].mxu0 %v860
        %v1464 = vpop.f32.mrb[0].mxu0
        %v1465 = vadd.f32 %v745, %v1464
        %v1466 = vpop.f32.mrb[0].mxu0
        %v1467 = vadd.f32 %v745, %v1466
        %v1468 = vpop.f32.mrb[0].mxu0
        %v1469 = vadd.f32 %v750, %v1468
        %v1470 = vpop.f32.mrb[0].mxu0
        %v1471 = vadd.f32 %v750, %v1470
        %1472 = vmatprep.mubr.bf16.mxu0 %v864
        %1473 = vmatmul.mubr.bf16.gmra.mrb[0].mxu0 %v863
        %v1474 = vpop.f32.mrb[0].mxu0
        %v1475 = vadd.f32 %v755, %v1474
        %v1476 = vpop.f32.mrb[0].mxu0
        %v1477 = vadd.f32 %v755, %v1476
        %v1478 = vpop.f32.mrb[0].mxu0
        %v1479 = vadd.f32 %v760, %v1478
        %v1480 = vpop.f32.mrb[0].mxu0
        %v1481 = vadd.f32 %v760, %v1480
        %1482 = vdwg.mxu0
        %1483 = vmatprep.subr.bf16.mxu0 %v1243
        %1484 = vmatpush1.bf16.msra.mxu0 %v1242
        %1485 = vmatprep.subr.bf16.mxu0 %v1247
        %1486 = vmatpush1.bf16.msra.mxu0 %v1246
        %1487 = vmatprep.subr.bf16.mxu0 %v1251
        %1488 = vmatpush1.bf16.msra.mxu0 %v1250
        %1489 = vmatprep.subr.bf16.mxu0 %v1255
        %1490 = vmatpush1.bf16.msra.mxu0 %v1254
        %1491 = vmatprep.subr.bf16.mxu0 %v1259
        %1492 = vmatpush1.bf16.msra.mxu0 %v1258
        %1493 = vmatprep.subr.bf16.mxu0 %v1263
        %1494 = vmatpush1.bf16.msra.mxu0 %v1262
        %1495 = vmatprep.subr.bf16.mxu0 %v1267
        %1496 = vmatpush1.bf16.msra.mxu0 %v1266
        %1497 = vmatprep.subr.bf16.mxu0 %v1271
        %1498 = vmatpush1.bf16.msra.mxu0 %v1270
        %1499 = vmatprep.subr.bf16.mxu0 0
        %1500 = vmatpush1.bf16.msra.mxu0 0
        %1501 = vmatprep.subr.bf16.mxu0 0
        %1502 = vmatpush1.bf16.msra.mxu0 0
        %1503 = vmatprep.subr.bf16.mxu0 0
        %1504 = vmatpush1.bf16.msra.mxu0 0
        %1505 = vmatprep.subr.bf16.mxu0 0
        %1506 = vmatpush1.bf16.msra.mxu0 0
        %1507 = vmatprep.subr.bf16.mxu0 0
        %1508 = vmatpush1.bf16.msra.mxu0 0
        %1509 = vmatprep.subr.bf16.mxu0 0
        %1510 = vmatpush1.bf16.msra.mxu0 0
        %1511 = vmatprep.subr.bf16.mxu0 0
        %1512 = vmatpush1.bf16.msra.mxu0 0
        %1513 = vmatprep.subr.bf16.mxu0 0
        %1514 = vmatpush1.bf16.msra.mxu0 0
        %1515 = vmatprep.mubr.bf16.mxu0 0
        %1516 = vmatmul.mubr.bf16.gmra.mrb[0].mxu0 %v844
        %v1517 = vpop.f32.mrb[0].mxu0
        %v1518 = vadd.f32 %v1405, %v1517
        %v1519 = vpop.f32.mrb[0].mxu0
        %v1520 = vadd.f32 %v1407, %v1519
        %v1521 = vpop.f32.mrb[0].mxu0
        %v1522 = vadd.f32 %v1409, %v1521
        %v1523 = vpop.f32.mrb[0].mxu0
        %v1524 = vadd.f32 %v1411, %v1523
        %1525 = vmatprep.mubr.bf16.mxu0 0
        %1526 = vmatmul.mubr.bf16.gmra.mrb[0].mxu0 %v847
        %v1527 = vpop.f32.mrb[0].mxu0
        %v1528 = vadd.f32 %v1415, %v1527
        %v1529 = vpop.f32.mrb[0].mxu0
        %v1530 = vadd.f32 %v1417, %v1529
        %v1531 = vpop.f32.mrb[0].mxu0
        %v1532 = vadd.f32 %v1419, %v1531
        %v1533 = vpop.f32.mrb[0].mxu0
        %v1534 = vadd.f32 %v1421, %v1533
        %1535 = vmatprep.mubr.bf16.mxu0 0
        %1536 = vmatmul.mubr.bf16.gmra.mrb[0].mxu0 %v850
        %v1537 = vpop.f32.mrb[0].mxu0
        %v1538 = vadd.f32 %v1425, %v1537
        %v1539 = vpop.f32.mrb[0].mxu0
        %v1540 = vadd.f32 %v1427, %v1539
        %v1541 = vpop.f32.mrb[0].mxu0
        %v1542 = vadd.f32 %v1429, %v1541
        %v1543 = vpop.f32.mrb[0].mxu0
        %v1544 = vadd.f32 %v1431, %v1543
        %1545 = vmatprep.mubr.bf16.mxu0 0
        %1546 = vmatmul.mubr.bf16.gmra.mrb[0].mxu0 %v853
        %v1547 = vpop.f32.mrb[0].mxu0
        %v1548 = vadd.f32 %v1435, %v1547
        %v1549 = vpop.f32.mrb[0].mxu0
        %v1550 = vadd.f32 %v1437, %v1549
        %v1551 = vpop.f32.mrb[0].mxu0
        %v1552 = vadd.f32 %v1439, %v1551
        %v1553 = vpop.f32.mrb[0].mxu0
        %v1554 = vadd.f32 %v1441, %v1553
        %1555 = vmatprep.mubr.bf16.mxu0 0
        %1556 = vmatmul.mubr.bf16.gmra.mrb[0].mxu0 %v856
        %v1557 = vpop.f32.mrb[0].mxu0
        %v1558 = vadd.f32 %v1445, %v1557
        %v1559 = vpop.f32.mrb[0].mxu0
        %v1560 = vadd.f32 %v1447, %v1559
        %v1561 = vpop.f32.mrb[0].mxu0
        %v1562 = vadd.f32 %v1449, %v1561
        %v1563 = vpop.f32.mrb[0].mxu0
        %v1564 = vadd.f32 %v1451, %v1563
        %1565 = vmatprep.mubr.bf16.mxu0 0
        %1566 = vmatmul.mubr.bf16.gmra.mrb[0].mxu0 %v859
        %v1567 = vpop.f32.mrb[0].mxu0
        %v1568 = vadd.f32 %v1455, %v1567
        %v1569 = vpop.f32.mrb[0].mxu0
        %v1570 = vadd.f32 %v1457, %v1569
        %v1571 = vpop.f32.mrb[0].mxu0
        %v1572 = vadd.f32 %v1459, %v1571
        %v1573 = vpop.f32.mrb[0].mxu0
        %v1574 = vadd.f32 %v1461, %v1573
        %1575 = vmatprep.mubr.bf16.mxu0 0
        %1576 = vmatmul.mubr.bf16.gmra.mrb[0].mxu0 %v862
        %v1577 = vpop.f32.mrb[0].mxu0
        %v1578 = vadd.f32 %v1465, %v1577
        %v1579 = vpop.f32.mrb[0].mxu0
        %v1580 = vadd.f32 %v1467, %v1579
        %v1581 = vpop.f32.mrb[0].mxu0
        %v1582 = vadd.f32 %v1469, %v1581
        %v1583 = vpop.f32.mrb[0].mxu0
        %v1584 = vadd.f32 %v1471, %v1583
        %1585 = vmatprep.mubr.bf16.mxu0 0
        %1586 = vmatmul.mubr.bf16.gmra.mrb[0].mxu0 %v865
        %v1587 = vpop.f32.mrb[0].mxu0
        %v1588 = vadd.f32 %v1475, %v1587
        %v1589 = vpop.f32.mrb[0].mxu0
        %v1590 = vadd.f32 %v1477, %v1589
        %v1591 = vpop.f32.mrb[0].mxu0
        %v1592 = vadd.f32 %v1479, %v1591
        %v1593 = vpop.f32.mrb[0].mxu0
        %v1594 = vadd.f32 %v1481, %v1593
        %1595 = vdwg.mxu0
        %1596 = vmatprep.subr.bf16.mxu0 %v1181
        %1597 = vmatpush1.bf16.msra.mxu0 %v1180
        %1598 = vmatprep.subr.bf16.mxu0 %v1185
        %1599 = vmatpush1.bf16.msra.mxu0 %v1184
        %1600 = vmatprep.subr.bf16.mxu0 %v1189
        %1601 = vmatpush1.bf16.msra.mxu0 %v1188
        %1602 = vmatprep.subr.bf16.mxu0 %v1193
        %1603 = vmatpush1.bf16.msra.mxu0 %v1192
        %1604 = vmatprep.subr.bf16.mxu0 %v1197
        %1605 = vmatpush1.bf16.msra.mxu0 %v1196
        %1606 = vmatprep.subr.bf16.mxu0 %v1201
        %1607 = vmatpush1.bf16.msra.mxu0 %v1200
        %1608 = vmatprep.subr.bf16.mxu0 %v1205
        %1609 = vmatpush1.bf16.msra.mxu0 %v1204
        %1610 = vmatprep.subr.bf16.mxu0 %v1209
        %1611 = vmatpush1.bf16.msra.mxu0 %v1208
        %1612 = vmatprep.subr.bf16.mxu0 %v1213
        %1613 = vmatpush1.bf16.msra.mxu0 %v1212
        %1614 = vmatprep.subr.bf16.mxu0 %v1217
        %1615 = vmatpush1.bf16.msra.mxu0 %v1216
        %1616 = vmatprep.subr.bf16.mxu0 %v1221
        %1617 = vmatpush1.bf16.msra.mxu0 %v1220
        %1618 = vmatprep.subr.bf16.mxu0 %v1225
        %1619 = vmatpush1.bf16.msra.mxu0 %v1224
        %1620 = vmatprep.subr.bf16.mxu0 %v1229
        %1621 = vmatpush1.bf16.msra.mxu0 %v1228
        %1622 = vmatprep.subr.bf16.mxu0 %v1233
        %1623 = vmatpush1.bf16.msra.mxu0 %v1232
        %1624 = vmatprep.subr.bf16.mxu0 %v1237
        %1625 = vmatpush1.bf16.msra.mxu0 %v1236
        %1626 = vmatprep.subr.bf16.mxu0 %v1241
        %1627 = vmatpush1.bf16.msra.mxu0 %v1240
        %1628 = vmatprep.mubr.bf16.mxu0 %v843
        %1629 = vmatmul.mubr.bf16.gmra.mrb[0].mxu0 %v842
        %v1630 = vpop.f32.mrb[0].mxu0
        %v1631 = vadd.f32 %v685, %v1630
        %v1632 = vpop.f32.mrb[0].mxu0
        %v1633 = vadd.f32 %v685, %v1632
        %v1634 = vpop.f32.mrb[0].mxu0
        %v1635 = vadd.f32 %v690, %v1634
        %v1636 = vpop.f32.mrb[0].mxu0
        %v1637 = vadd.f32 %v690, %v1636
        %1638 = vmatprep.mubr.bf16.mxu0 %v846
        %1639 = vmatmul.mubr.bf16.gmra.mrb[0].mxu0 %v845
        %v1640 = vpop.f32.mrb[0].mxu0
        %v1641 = vadd.f32 %v695, %v1640
        %v1642 = vpop.f32.mrb[0].mxu0
        %v1643 = vadd.f32 %v695, %v1642
        %v1644 = vpop.f32.mrb[0].mxu0
        %v1645 = vadd.f32 %v700, %v1644
        %v1646 = vpop.f32.mrb[0].mxu0
        %v1647 = vadd.f32 %v700, %v1646
        %1648 = vmatprep.mubr.bf16.mxu0 %v849
        %1649 = vmatmul.mubr.bf16.gmra.mrb[0].mxu0 %v848
        %v1650 = vpop.f32.mrb[0].mxu0
        %v1651 = vadd.f32 %v705, %v1650
        %v1652 = vpop.f32.mrb[0].mxu0
        %v1653 = vadd.f32 %v705, %v1652
        %v1654 = vpop.f32.mrb[0].mxu0
        %v1655 = vadd.f32 %v710, %v1654
        %v1656 = vpop.f32.mrb[0].mxu0
        %v1657 = vadd.f32 %v710, %v1656
        %1658 = vmatprep.mubr.bf16.mxu0 %v852
        %1659 = vmatmul.mubr.bf16.gmra.mrb[0].mxu0 %v851
        %v1660 = vpop.f32.mrb[0].mxu0
        %v1661 = vadd.f32 %v715, %v1660
        %v1662 = vpop.f32.mrb[0].mxu0
        %v1663 = vadd.f32 %v715, %v1662
        %v1664 = vpop.f32.mrb[0].mxu0
        %v1665 = vadd.f32 %v720, %v1664
        %v1666 = vpop.f32.mrb[0].mxu0
        %v1667 = vadd.f32 %v720, %v1666
        %1668 = vmatprep.mubr.bf16.mxu0 %v855
        %1669 = vmatmul.mubr.bf16.gmra.mrb[0].mxu0 %v854
        %v1670 = vpop.f32.mrb[0].mxu0
        %v1671 = vadd.f32 %v725, %v1670
        %v1672 = vpop.f32.mrb[0].mxu0
        %v1673 = vadd.f32 %v725, %v1672
        %v1674 = vpop.f32.mrb[0].mxu0
        %v1675 = vadd.f32 %v730, %v1674
        %v1676 = vpop.f32.mrb[0].mxu0
        %v1677 = vadd.f32 %v730, %v1676
        %1678 = vmatprep.mubr.bf16.mxu0 %v858
        %1679 = vmatmul.mubr.bf16.gmra.mrb[0].mxu0 %v857
        %v1680 = vpop.f32.mrb[0].mxu0
        %v1681 = vadd.f32 %v735, %v1680
        %v1682 = vpop.f32.mrb[0].mxu0
        %v1683 = vadd.f32 %v735, %v1682
        %v1684 = vpop.f32.mrb[0].mxu0
        %v1685 = vadd.f32 %v740, %v1684
        %v1686 = vpop.f32.mrb[0].mxu0
        %v1687 = vadd.f32 %v740, %v1686
        %1688 = vmatprep.mubr.bf16.mxu0 %v861
        %1689 = vmatmul.mubr.bf16.gmra.mrb[0].mxu0 %v860
        %v1690 = vpop.f32.mrb[0].mxu0
        %v1691 = vadd.f32 %v745, %v1690
        %v1692 = vpop.f32.mrb[0].mxu0
        %v1693 = vadd.f32 %v745, %v1692
        %v1694 = vpop.f32.mrb[0].mxu0
        %v1695 = vadd.f32 %v750, %v1694
        %v1696 = vpop.f32.mrb[0].mxu0
        %v1697 = vadd.f32 %v750, %v1696
        %1698 = vmatprep.mubr.bf16.mxu0 %v864
        %1699 = vmatmul.mubr.bf16.gmra.mrb[0].mxu0 %v863
        %v1700 = vpop.f32.mrb[0].mxu0
        %v1701 = vadd.f32 %v755, %v1700
        %v1702 = vpop.f32.mrb[0].mxu0
        %v1703 = vadd.f32 %v755, %v1702
        %v1704 = vpop.f32.mrb[0].mxu0
        %v1705 = vadd.f32 %v760, %v1704
        %v1706 = vpop.f32.mrb[0].mxu0
        %v1707 = vadd.f32 %v760, %v1706
        %1708 = vdwg.mxu0
        %1709 = vmatprep.subr.bf16.mxu0 %v1245
        %1710 = vmatpush1.bf16.msra.mxu0 %v1244
        %1711 = vmatprep.subr.bf16.mxu0 %v1249
        %1712 = vmatpush1.bf16.msra.mxu0 %v1248
        %1713 = vmatprep.subr.bf16.mxu0 %v1253
        %1714 = vmatpush1.bf16.msra.mxu0 %v1252
        %1715 = vmatprep.subr.bf16.mxu0 %v1257
        %1716 = vmatpush1.bf16.msra.mxu0 %v1256
        %1717 = vmatprep.subr.bf16.mxu0 %v1261
        %1718 = vmatpush1.bf16.msra.mxu0 %v1260
        %1719 = vmatprep.subr.bf16.mxu0 %v1265
        %1720 = vmatpush1.bf16.msra.mxu0 %v1264
        %1721 = vmatprep.subr.bf16.mxu0 %v1269
        %1722 = vmatpush1.bf16.msra.mxu0 %v1268
        %1723 = vmatprep.subr.bf16.mxu0 %v1273
        %1724 = vmatpush1.bf16.msra.mxu0 %v1272
        %1725 = vmatprep.subr.bf16.mxu0 0
        %1726 = vmatpush1.bf16.msra.mxu0 0
        %1727 = vmatprep.subr.bf16.mxu0 0
        %1728 = vmatpush1.bf16.msra.mxu0 0
        %1729 = vmatprep.subr.bf16.mxu0 0
        %1730 = vmatpush1.bf16.msra.mxu0 0
        %1731 = vmatprep.subr.bf16.mxu0 0
        %1732 = vmatpush1.bf16.msra.mxu0 0
        %1733 = vmatprep.subr.bf16.mxu0 0
        %1734 = vmatpush1.bf16.msra.mxu0 0
        %1735 = vmatprep.subr.bf16.mxu0 0
        %1736 = vmatpush1.bf16.msra.mxu0 0
        %1737 = vmatprep.subr.bf16.mxu0 0
        %1738 = vmatpush1.bf16.msra.mxu0 0
        %1739 = vmatprep.subr.bf16.mxu0 0
        %1740 = vmatpush1.bf16.msra.mxu0 0
        %1741 = vmatprep.mubr.bf16.mxu0 0
        %1742 = vmatmul.mubr.bf16.gmra.mrb[0].mxu0 %v844
        %v1743 = vpop.f32.mrb[0].mxu0
        %v1744 = vadd.f32 %v1631, %v1743
        %v1745 = vpop.f32.mrb[0].mxu0
        %v1746 = vadd.f32 %v1633, %v1745
        %v1747 = vpop.f32.mrb[0].mxu0
        %v1748 = vadd.f32 %v1635, %v1747
        %v1749 = vpop.f32.mrb[0].mxu0
        %v1750 = vadd.f32 %v1637, %v1749
        %1751 = vmatprep.mubr.bf16.mxu0 0
        %1752 = vmatmul.mubr.bf16.gmra.mrb[0].mxu0 %v847
        %v1753 = vpop.f32.mrb[0].mxu0
        %v1754 = vadd.f32 %v1641, %v1753
        %v1755 = vpop.f32.mrb[0].mxu0
        %v1756 = vadd.f32 %v1643, %v1755
        %v1757 = vpop.f32.mrb[0].mxu0
        %v1758 = vadd.f32 %v1645, %v1757
        %v1759 = vpop.f32.mrb[0].mxu0
        %v1760 = vadd.f32 %v1647, %v1759
        %1761 = vmatprep.mubr.bf16.mxu0 0
        %1762 = vmatmul.mubr.bf16.gmra.mrb[0].mxu0 %v850
        %v1763 = vpop.f32.mrb[0].mxu0
        %v1764 = vadd.f32 %v1651, %v1763
        %v1765 = vpop.f32.mrb[0].mxu0
        %v1766 = vadd.f32 %v1653, %v1765
        %v1767 = vpop.f32.mrb[0].mxu0
        %v1768 = vadd.f32 %v1655, %v1767
        %v1769 = vpop.f32.mrb[0].mxu0
        %v1770 = vadd.f32 %v1657, %v1769
        %1771 = vmatprep.mubr.bf16.mxu0 0
        %1772 = vmatmul.mubr.bf16.gmra.mrb[0].mxu0 %v853
        %v1773 = vpop.f32.mrb[0].mxu0
        %v1774 = vadd.f32 %v1661, %v1773
        %v1775 = vpop.f32.mrb[0].mxu0
        %v1776 = vadd.f32 %v1663, %v1775
        %v1777 = vpop.f32.mrb[0].mxu0
        %v1778 = vadd.f32 %v1665, %v1777
        %v1779 = vpop.f32.mrb[0].mxu0
        %v1780 = vadd.f32 %v1667, %v1779
        %1781 = vmatprep.mubr.bf16.mxu0 0
        %1782 = vmatmul.mubr.bf16.gmra.mrb[0].mxu0 %v856
        %v1783 = vpop.f32.mrb[0].mxu0
        %v1784 = vadd.f32 %v1671, %v1783
        %v1785 = vpop.f32.mrb[0].mxu0
        %v1786 = vadd.f32 %v1673, %v1785
        %v1787 = vpop.f32.mrb[0].mxu0
        %v1788 = vadd.f32 %v1675, %v1787
        %v1789 = vpop.f32.mrb[0].mxu0
        %v1790 = vadd.f32 %v1677, %v1789
        %1791 = vmatprep.mubr.bf16.mxu0 0
        %1792 = vmatmul.mubr.bf16.gmra.mrb[0].mxu0 %v859
        %v1793 = vpop.f32.mrb[0].mxu0
        %v1794 = vadd.f32 %v1681, %v1793
        %v1795 = vpop.f32.mrb[0].mxu0
        %v1796 = vadd.f32 %v1683, %v1795
        %v1797 = vpop.f32.mrb[0].mxu0
        %v1798 = vadd.f32 %v1685, %v1797
        %v1799 = vpop.f32.mrb[0].mxu0
        %v1800 = vadd.f32 %v1687, %v1799
        %1801 = vmatprep.mubr.bf16.mxu0 0
        %1802 = vmatmul.mubr.bf16.gmra.mrb[0].mxu0 %v862
        %v1803 = vpop.f32.mrb[0].mxu0
        %v1804 = vadd.f32 %v1691, %v1803
        %v1805 = vpop.f32.mrb[0].mxu0
        %v1806 = vadd.f32 %v1693, %v1805
        %v1807 = vpop.f32.mrb[0].mxu0
        %v1808 = vadd.f32 %v1695, %v1807
        %v1809 = vpop.f32.mrb[0].mxu0
        %v1810 = vadd.f32 %v1697, %v1809
        %1811 = vmatprep.mubr.bf16.mxu0 0
        %1812 = vmatmul.mubr.bf16.gmra.mrb[0].mxu0 %v865
        %v1813 = vpop.f32.mrb[0].mxu0
        %v1814 = vadd.f32 %v1701, %v1813
        %v1815 = vpop.f32.mrb[0].mxu0
        %v1816 = vadd.f32 %v1703, %v1815
        %v1817 = vpop.f32.mrb[0].mxu0
        %v1818 = vadd.f32 %v1705, %v1817
        %v1819 = vpop.f32.mrb[0].mxu0
        %v1820 = vadd.f32 %v1707, %v1819
        %1821 = vdwg.mxu0
        %v1822 = vld [vmem:[%s499] sm:$0xff]
        %v1823 = vld [vmem:[%s499 + $0x8] sm:$0xff]
        %v1824 = vld [vmem:[%s499 + $0x10] sm:$0xff]
        %v1825 = vld [vmem:[%s499 + $0x18] sm:$0xff]
        %v1826 = vld [vmem:[%s499 + $0x20] sm:$0xff]
        %v1827 = vld [vmem:[%s499 + $0x28] sm:$0xff]
        %v1828 = vld [vmem:[%s499 + $0x30] sm:$0xff]
        %v1829 = vld [vmem:[%s499 + $0x38] sm:$0xff]
        %v1830 = vld [vmem:[%s499 + $0x40] sm:$0xff]
        %v1831 = vld [vmem:[%s499 + $0x48] sm:$0xff]
        %v1832 = vld [vmem:[%s499 + $0x50] sm:$0xff]
        %v1833 = vld [vmem:[%s499 + $0x58] sm:$0xff]
        %v1834 = vld [vmem:[%s499 + $0x60] sm:$0xff]
        %v1835 = vld [vmem:[%s499 + $0x68] sm:$0xff]
        %v1836 = vld [vmem:[%s499 + $0x70] sm:$0xff]
        %v1837 = vld [vmem:[%s499 + $0x78] sm:$0xff]
        %v1838 = vld [vmem:[%s4] sm:$0xff]
        %v1839 = vld [vmem:[%s4 + $0x8] sm:$0xff]
        %v1840 = vld [vmem:[%s4 + $0x10] sm:$0xff]
        %v1841 = vld [vmem:[%s4 + $0x18] sm:$0xff]
        %v1842 = vld [vmem:[%s4 + $0x20] sm:$0xff]
        %v1843 = vld [vmem:[%s4 + $0x28] sm:$0xff]
        %v1844 = vld [vmem:[%s4 + $0x30] sm:$0xff]
        %v1845 = vld [vmem:[%s4 + $0x38] sm:$0xff]
        %v1846 = vld [vmem:[%s4 + $0x40] sm:$0xff]
        %v1847 = vld [vmem:[%s4 + $0x48] sm:$0xff]
        %v1848 = vld [vmem:[%s4 + $0x50] sm:$0xff]
        %v1849 = vld [vmem:[%s4 + $0x58] sm:$0xff]
        %v1850 = vld [vmem:[%s4 + $0x60] sm:$0xff]
        %v1851 = vld [vmem:[%s4 + $0x68] sm:$0xff]
        %v1852 = vld [vmem:[%s4 + $0x70] sm:$0xff]
        %v1853 = vld [vmem:[%s4 + $0x78] sm:$0xff]
        %v1854 = vld [vmem:[%s4 + $0x80] sm:$0xff]
        %v1855 = vld [vmem:[%s4 + $0x88] sm:$0xff]
        %v1856 = vld [vmem:[%s4 + $0x90] sm:$0xff]
        %v1857 = vld [vmem:[%s4 + $0x98] sm:$0xff]
        %v1858 = vld [vmem:[%s4 + $0xa0] sm:$0xff]
        %v1859 = vld [vmem:[%s4 + $0xa8] sm:$0xff]
        %v1860 = vld [vmem:[%s4 + $0xb0] sm:$0xff]
        %v1861 = vld [vmem:[%s4 + $0xb8] sm:$0xff]
        %v1862 = vld [vmem:[%s4 + $0xc0] sm:$0xff]
        %v1863 = vld [vmem:[%s4 + $0xc8] sm:$0xff]
        %v1864 = vld [vmem:[%s4 + $0xd0] sm:$0xff]
        %v1865 = vld [vmem:[%s4 + $0xd8] sm:$0xff]
        %v1866 = vld [vmem:[%s4 + $0xe0] sm:$0xff]
        %v1867 = vld [vmem:[%s4 + $0xe8] sm:$0xff]
        %v1868 = vld [vmem:[%s4 + $0xf0] sm:$0xff]
        %v1869 = vld [vmem:[%s4 + $0xf8] sm:$0xff]
        %v1870 = vld [vmem:[%s4 + $0x100] sm:$0xff]
        %v1871 = vld [vmem:[%s4 + $0x108] sm:$0xff]
        %v1872 = vld [vmem:[%s4 + $0x110] sm:$0xff]
        %v1873 = vld [vmem:[%s4 + $0x118] sm:$0xff]
        %v1874 = vld [vmem:[%s4 + $0x120] sm:$0xff]
        %v1875 = vld [vmem:[%s4 + $0x128] sm:$0xff]
        %v1876 = vld [vmem:[%s4 + $0x130] sm:$0xff]
        %v1877 = vld [vmem:[%s4 + $0x138] sm:$0xff]
        %v1878 = vld [vmem:[%s4 + $0x140] sm:$0xff]
        %v1879 = vld [vmem:[%s4 + $0x148] sm:$0xff]
        %v1880 = vld [vmem:[%s4 + $0x150] sm:$0xff]
        %v1881 = vld [vmem:[%s4 + $0x158] sm:$0xff]
        %v1882 = vld [vmem:[%s4 + $0x160] sm:$0xff]
        %v1883 = vld [vmem:[%s4 + $0x168] sm:$0xff]
        %v1884 = vld [vmem:[%s4 + $0x170] sm:$0xff]
        %v1885 = vld [vmem:[%s4 + $0x178] sm:$0xff]
        %v1886 = vmul.f32 %v1822, %v1838
        %v1887 = vmul.f32 %v1823, %v1839
        %v1888 = vmul.f32 %v1824, %v1840
        %v1889 = vmul.f32 %v1825, %v1841
        %v1890 = vmul.f32 %v1826, %v1842
        %v1891 = vmul.f32 %v1827, %v1843
        %v1892 = vmul.f32 %v1828, %v1844
        %v1893 = vmul.f32 %v1829, %v1845
        %v1894 = vmul.f32 %v1830, %v1846
        %v1895 = vmul.f32 %v1831, %v1847
        %v1896 = vmul.f32 %v1832, %v1848
        %v1897 = vmul.f32 %v1833, %v1849
        %v1898 = vmul.f32 %v1834, %v1850
        %v1899 = vmul.f32 %v1835, %v1851
        %v1900 = vmul.f32 %v1836, %v1852
        %v1901 = vmul.f32 %v1837, %v1853
        %v1902 = vadd.f32 %v1518, %v1886
        %v1903 = vadd.f32 %v1520, %v1887
        %v1904 = vadd.f32 %v1744, %v1888
        %v1905 = vadd.f32 %v1746, %v1889
        %v1906 = vadd.f32 %v1522, %v1890
        %v1907 = vadd.f32 %v1524, %v1891
        %v1908 = vadd.f32 %v1748, %v1892
        %v1909 = vadd.f32 %v1750, %v1893
        %v1910 = vadd.f32 %v1528, %v1894
        %v1911 = vadd.f32 %v1530, %v1895
        %v1912 = vadd.f32 %v1754, %v1896
        %v1913 = vadd.f32 %v1756, %v1897
        %v1914 = vadd.f32 %v1532, %v1898
        %v1915 = vadd.f32 %v1534, %v1899
        %v1916 = vadd.f32 %v1758, %v1900
        %v1917 = vadd.f32 %v1760, %v1901
        %v1918 = vxor.u32 %v1902, 2147483648
        %v1919 = vxor.u32 %v1903, 2147483648
        %v1920 = vxor.u32 %v1904, 2147483648
        %v1921 = vxor.u32 %v1905, 2147483648
        %v1922 = vxor.u32 %v1906, 2147483648
        %v1923 = vxor.u32 %v1907, 2147483648
        %v1924 = vxor.u32 %v1908, 2147483648
        %v1925 = vxor.u32 %v1909, 2147483648
        %v1926 = vxor.u32 %v1910, 2147483648
        %v1927 = vxor.u32 %v1911, 2147483648
        %v1928 = vxor.u32 %v1912, 2147483648
        %v1929 = vxor.u32 %v1913, 2147483648
        %v1930 = vxor.u32 %v1914, 2147483648
        %v1931 = vxor.u32 %v1915, 2147483648
        %v1932 = vxor.u32 %v1916, 2147483648
        %v1933 = vxor.u32 %v1917, 2147483648
        %v1934 = vmul.f32 %v1918, 1.442695
        %v1935 = vpow.pop %v1934
        %v1936 = vmul.f32 %v1919, 1.442695
        %v1937 = vpow.pop %v1936
        %v1938 = vmul.f32 %v1920, 1.442695
        %v1939 = vpow.pop %v1938
        %v1940 = vmul.f32 %v1921, 1.442695
        %v1941 = vpow.pop %v1940
        %v1942 = vmul.f32 %v1922, 1.442695
        %v1943 = vpow.pop %v1942
        %v1944 = vmul.f32 %v1923, 1.442695
        %v1945 = vpow.pop %v1944
        %v1946 = vmul.f32 %v1924, 1.442695
        %v1947 = vpow.pop %v1946
        %v1948 = vmul.f32 %v1925, 1.442695
        %v1949 = vpow.pop %v1948
        %v1950 = vmul.f32 %v1926, 1.442695
        %v1951 = vpow.pop %v1950
        %v1952 = vmul.f32 %v1927, 1.442695
        %v1953 = vpow.pop %v1952
        %v1954 = vmul.f32 %v1928, 1.442695
        %v1955 = vpow.pop %v1954
        %v1956 = vmul.f32 %v1929, 1.442695
        %v1957 = vpow.pop %v1956
        %v1958 = vmul.f32 %v1930, 1.442695
        %v1959 = vpow.pop %v1958
        %v1960 = vmul.f32 %v1931, 1.442695
        %v1961 = vpow.pop %v1960
        %v1962 = vmul.f32 %v1932, 1.442695
        %v1963 = vpow.pop %v1962
        %v1964 = vmul.f32 %v1933, 1.442695
        %v1965 = vpow.pop %v1964
        %v1966 = vadd.f32 %v1935, 1.0
        %v1967 = vadd.f32 %v1937, 1.0
        %v1968 = vadd.f32 %v1939, 1.0
        %v1969 = vadd.f32 %v1941, 1.0
        %v1970 = vadd.f32 %v1943, 1.0
        %v1971 = vadd.f32 %v1945, 1.0
        %v1972 = vadd.f32 %v1947, 1.0
        %v1973 = vadd.f32 %v1949, 1.0
        %v1974 = vadd.f32 %v1951, 1.0
        %v1975 = vadd.f32 %v1953, 1.0
        %v1976 = vadd.f32 %v1955, 1.0
        %v1977 = vadd.f32 %v1957, 1.0
        %v1978 = vadd.f32 %v1959, 1.0
        %v1979 = vadd.f32 %v1961, 1.0
        %v1980 = vadd.f32 %v1963, 1.0
        %v1981 = vadd.f32 %v1965, 1.0
        %v1982 = vrcp.pop %v1966
        %v1983 = vmul.f32 1.0, %v1982
        %v1984 = vrcp.pop %v1967
        %v1985 = vmul.f32 1.0, %v1984
        %v1986 = vrcp.pop %v1968
        %v1987 = vmul.f32 1.0, %v1986
        %v1988 = vrcp.pop %v1969
        %v1989 = vmul.f32 1.0, %v1988
        %v1990 = vrcp.pop %v1970
        %v1991 = vmul.f32 1.0, %v1990
        %v1992 = vrcp.pop %v1971
        %v1993 = vmul.f32 1.0, %v1992
        %v1994 = vrcp.pop %v1972
        %v1995 = vmul.f32 1.0, %v1994
        %v1996 = vrcp.pop %v1973
        %v1997 = vmul.f32 1.0, %v1996
        %v1998 = vrcp.pop %v1974
        %v1999 = vmul.f32 1.0, %v1998
        %v2000 = vrcp.pop %v1975
        %v2001 = vmul.f32 1.0, %v2000
        %v2002 = vrcp.pop %v1976
        %v2003 = vmul.f32 1.0, %v2002
        %v2004 = vrcp.pop %v1977
        %v2005 = vmul.f32 1.0, %v2004
        %v2006 = vrcp.pop %v1978
        %v2007 = vmul.f32 1.0, %v2006
        %v2008 = vrcp.pop %v1979
        %v2009 = vmul.f32 1.0, %v2008
        %v2010 = vrcp.pop %v1980
        %v2011 = vmul.f32 1.0, %v2010
        %v2012 = vrcp.pop %v1981
        %v2013 = vmul.f32 1.0, %v2012
        %v2014 = vmul.f32 %v1822, %v1854
        %v2015 = vmul.f32 %v1823, %v1855
        %v2016 = vmul.f32 %v1824, %v1856
        %v2017 = vmul.f32 %v1825, %v1857
        %v2018 = vmul.f32 %v1826, %v1858
        %v2019 = vmul.f32 %v1827, %v1859
        %v2020 = vmul.f32 %v1828, %v1860
        %v2021 = vmul.f32 %v1829, %v1861
        %v2022 = vmul.f32 %v1830, %v1862
        %v2023 = vmul.f32 %v1831, %v1863
        %v2024 = vmul.f32 %v1832, %v1864
        %v2025 = vmul.f32 %v1833, %v1865
        %v2026 = vmul.f32 %v1834, %v1866
        %v2027 = vmul.f32 %v1835, %v1867
        %v2028 = vmul.f32 %v1836, %v1868
        %v2029 = vmul.f32 %v1837, %v1869
        %v2030 = vadd.f32 %v1538, %v2014
        %v2031 = vadd.f32 %v1540, %v2015
        %v2032 = vadd.f32 %v1764, %v2016
        %v2033 = vadd.f32 %v1766, %v2017
        %v2034 = vadd.f32 %v1542, %v2018
        %v2035 = vadd.f32 %v1544, %v2019
        %v2036 = vadd.f32 %v1768, %v2020
        %v2037 = vadd.f32 %v1770, %v2021
        %v2038 = vadd.f32 %v1548, %v2022
        %v2039 = vadd.f32 %v1550, %v2023
        %v2040 = vadd.f32 %v1774, %v2024
        %v2041 = vadd.f32 %v1776, %v2025
        %v2042 = vadd.f32 %v1552, %v2026
        %v2043 = vadd.f32 %v1554, %v2027
        %v2044 = vadd.f32 %v1778, %v2028
        %v2045 = vadd.f32 %v1780, %v2029
        %v2046 = vxor.u32 %v2030, 2147483648
        %v2047 = vxor.u32 %v2031, 2147483648
        %v2048 = vxor.u32 %v2032, 2147483648
        %v2049 = vxor.u32 %v2033, 2147483648
        %v2050 = vxor.u32 %v2034, 2147483648
        %v2051 = vxor.u32 %v2035, 2147483648
        %v2052 = vxor.u32 %v2036, 2147483648
        %v2053 = vxor.u32 %v2037, 2147483648
        %v2054 = vxor.u32 %v2038, 2147483648
        %v2055 = vxor.u32 %v2039, 2147483648
        %v2056 = vxor.u32 %v2040, 2147483648
        %v2057 = vxor.u32 %v2041, 2147483648
        %v2058 = vxor.u32 %v2042, 2147483648
        %v2059 = vxor.u32 %v2043, 2147483648
        %v2060 = vxor.u32 %v2044, 2147483648
        %v2061 = vxor.u32 %v2045, 2147483648
        %v2062 = vmul.f32 %v2046, 1.442695
        %v2063 = vpow.pop %v2062
        %v2064 = vmul.f32 %v2047, 1.442695
        %v2065 = vpow.pop %v2064
        %v2066 = vmul.f32 %v2048, 1.442695
        %v2067 = vpow.pop %v2066
        %v2068 = vmul.f32 %v2049, 1.442695
        %v2069 = vpow.pop %v2068
        %v2070 = vmul.f32 %v2050, 1.442695
        %v2071 = vpow.pop %v2070
        %v2072 = vmul.f32 %v2051, 1.442695
        %v2073 = vpow.pop %v2072
        %v2074 = vmul.f32 %v2052, 1.442695
        %v2075 = vpow.pop %v2074
        %v2076 = vmul.f32 %v2053, 1.442695
        %v2077 = vpow.pop %v2076
        %v2078 = vmul.f32 %v2054, 1.442695
        %v2079 = vpow.pop %v2078
        %v2080 = vmul.f32 %v2055, 1.442695
        %v2081 = vpow.pop %v2080
        %v2082 = vmul.f32 %v2056, 1.442695
        %v2083 = vpow.pop %v2082
        %v2084 = vmul.f32 %v2057, 1.442695
        %v2085 = vpow.pop %v2084
        %v2086 = vmul.f32 %v2058, 1.442695
        %v2087 = vpow.pop %v2086
        %v2088 = vmul.f32 %v2059, 1.442695
        %v2089 = vpow.pop %v2088
        %v2090 = vmul.f32 %v2060, 1.442695
        %v2091 = vpow.pop %v2090
        %v2092 = vmul.f32 %v2061, 1.442695
        %v2093 = vpow.pop %v2092
        %v2094 = vadd.f32 %v2063, 1.0
        %v2095 = vadd.f32 %v2065, 1.0
        %v2096 = vadd.f32 %v2067, 1.0
        %v2097 = vadd.f32 %v2069, 1.0
        %v2098 = vadd.f32 %v2071, 1.0
        %v2099 = vadd.f32 %v2073, 1.0
        %v2100 = vadd.f32 %v2075, 1.0
        %v2101 = vadd.f32 %v2077, 1.0
        %v2102 = vadd.f32 %v2079, 1.0
        %v2103 = vadd.f32 %v2081, 1.0
        %v2104 = vadd.f32 %v2083, 1.0
        %v2105 = vadd.f32 %v2085, 1.0
        %v2106 = vadd.f32 %v2087, 1.0
        %v2107 = vadd.f32 %v2089, 1.0
        %v2108 = vadd.f32 %v2091, 1.0
        %v2109 = vadd.f32 %v2093, 1.0
        %v2110 = vrcp.pop %v2094
        %v2111 = vmul.f32 1.0, %v2110
        %v2112 = vrcp.pop %v2095
        %v2113 = vmul.f32 1.0, %v2112
        %v2114 = vrcp.pop %v2096
        %v2115 = vmul.f32 1.0, %v2114
        %v2116 = vrcp.pop %v2097
        %v2117 = vmul.f32 1.0, %v2116
        %v2118 = vrcp.pop %v2098
        %v2119 = vmul.f32 1.0, %v2118
        %v2120 = vrcp.pop %v2099
        %v2121 = vmul.f32 1.0, %v2120
        %v2122 = vrcp.pop %v2100
        %v2123 = vmul.f32 1.0, %v2122
        %v2124 = vrcp.pop %v2101
        %v2125 = vmul.f32 1.0, %v2124
        %v2126 = vrcp.pop %v2102
        %v2127 = vmul.f32 1.0, %v2126
        %v2128 = vrcp.pop %v2103
        %v2129 = vmul.f32 1.0, %v2128
        %v2130 = vrcp.pop %v2104
        %v2131 = vmul.f32 1.0, %v2130
        %v2132 = vrcp.pop %v2105
        %v2133 = vmul.f32 1.0, %v2132
        %v2134 = vrcp.pop %v2106
        %v2135 = vmul.f32 1.0, %v2134
        %v2136 = vrcp.pop %v2107
        %v2137 = vmul.f32 1.0, %v2136
        %v2138 = vrcp.pop %v2108
        %v2139 = vmul.f32 1.0, %v2138
        %v2140 = vrcp.pop %v2109
        %v2141 = vmul.f32 1.0, %v2140
        %v2142 = vmul.f32 %v2111, %v1822
        %v2143 = vmul.f32 %v2113, %v1823
        %v2144 = vmul.f32 %v2115, %v1824
        %v2145 = vmul.f32 %v2117, %v1825
        %v2146 = vmul.f32 %v2119, %v1826
        %v2147 = vmul.f32 %v2121, %v1827
        %v2148 = vmul.f32 %v2123, %v1828
        %v2149 = vmul.f32 %v2125, %v1829
        %v2150 = vmul.f32 %v2127, %v1830
        %v2151 = vmul.f32 %v2129, %v1831
        %v2152 = vmul.f32 %v2131, %v1832
        %v2153 = vmul.f32 %v2133, %v1833
        %v2154 = vmul.f32 %v2135, %v1834
        %v2155 = vmul.f32 %v2137, %v1835
        %v2156 = vmul.f32 %v2139, %v1836
        %v2157 = vmul.f32 %v2141, %v1837
        %v2158 = vtanh.pop %v1558
        %v2159 = vtanh.pop %v1560
        %v2160 = vtanh.pop %v1784
        %v2161 = vtanh.pop %v1786
        %v2162 = vtanh.pop %v1562
        %v2163 = vtanh.pop %v1564
        %v2164 = vtanh.pop %v1788
        %v2165 = vtanh.pop %v1790
        %v2166 = vtanh.pop %v1568
        %v2167 = vtanh.pop %v1570
        %v2168 = vtanh.pop %v1794
        %v2169 = vtanh.pop %v1796
        %v2170 = vtanh.pop %v1572
        %v2171 = vtanh.pop %v1574
        %v2172 = vtanh.pop %v1798
        %v2173 = vtanh.pop %v1800
        %v2174 = vmul.f32 %v1983, %v2158
        %v2175 = vmul.f32 %v1985, %v2159
        %v2176 = vmul.f32 %v1987, %v2160
        %v2177 = vmul.f32 %v1989, %v2161
        %v2178 = vmul.f32 %v1991, %v2162
        %v2179 = vmul.f32 %v1993, %v2163
        %v2180 = vmul.f32 %v1995, %v2164
        %v2181 = vmul.f32 %v1997, %v2165
        %v2182 = vmul.f32 %v1999, %v2166
        %v2183 = vmul.f32 %v2001, %v2167
        %v2184 = vmul.f32 %v2003, %v2168
        %v2185 = vmul.f32 %v2005, %v2169
        %v2186 = vmul.f32 %v2007, %v2170
        %v2187 = vmul.f32 %v2009, %v2171
        %v2188 = vmul.f32 %v2011, %v2172
        %v2189 = vmul.f32 %v2013, %v2173
        %v2190 = vadd.f32 %v2142, %v2174
        %v2191 = vadd.f32 %v2143, %v2175
        %v2192 = vadd.f32 %v2144, %v2176
        %v2193 = vadd.f32 %v2145, %v2177
        %v2194 = vadd.f32 %v2146, %v2178
        %v2195 = vadd.f32 %v2147, %v2179
        %v2196 = vadd.f32 %v2148, %v2180
        %v2197 = vadd.f32 %v2149, %v2181
        %v2198 = vadd.f32 %v2150, %v2182
        %v2199 = vadd.f32 %v2151, %v2183
        %v2200 = vadd.f32 %v2152, %v2184
        %v2201 = vadd.f32 %v2153, %v2185
        %v2202 = vadd.f32 %v2154, %v2186
        %v2203 = vadd.f32 %v2155, %v2187
        %v2204 = vadd.f32 %v2156, %v2188
        %v2205 = vadd.f32 %v2157, %v2189
        %v2206 = vmul.f32 %v2190, %v1870
        %v2207 = vmul.f32 %v2191, %v1871
        %v2208 = vmul.f32 %v2192, %v1872
        %v2209 = vmul.f32 %v2193, %v1873
        %v2210 = vmul.f32 %v2194, %v1874
        %v2211 = vmul.f32 %v2195, %v1875
        %v2212 = vmul.f32 %v2196, %v1876
        %v2213 = vmul.f32 %v2197, %v1877
        %v2214 = vmul.f32 %v2198, %v1878
        %v2215 = vmul.f32 %v2199, %v1879
        %v2216 = vmul.f32 %v2200, %v1880
        %v2217 = vmul.f32 %v2201, %v1881
        %v2218 = vmul.f32 %v2202, %v1882
        %v2219 = vmul.f32 %v2203, %v1883
        %v2220 = vmul.f32 %v2204, %v1884
        %v2221 = vmul.f32 %v2205, %v1885
        %v2222 = vadd.f32 %v1578, %v2206
        %v2223 = vadd.f32 %v1580, %v2207
        %v2224 = vadd.f32 %v1804, %v2208
        %v2225 = vadd.f32 %v1806, %v2209
        %v2226 = vadd.f32 %v1582, %v2210
        %v2227 = vadd.f32 %v1584, %v2211
        %v2228 = vadd.f32 %v1808, %v2212
        %v2229 = vadd.f32 %v1810, %v2213
        %v2230 = vadd.f32 %v1588, %v2214
        %v2231 = vadd.f32 %v1590, %v2215
        %v2232 = vadd.f32 %v1814, %v2216
        %v2233 = vadd.f32 %v1816, %v2217
        %v2234 = vadd.f32 %v1592, %v2218
        %v2235 = vadd.f32 %v1594, %v2219
        %v2236 = vadd.f32 %v1818, %v2220
        %v2237 = vadd.f32 %v1820, %v2221
        %v2238 = vxor.u32 %v2222, 2147483648
        %v2239 = vxor.u32 %v2223, 2147483648
        %v2240 = vxor.u32 %v2224, 2147483648
        %v2241 = vxor.u32 %v2225, 2147483648
        %v2242 = vxor.u32 %v2226, 2147483648
        %v2243 = vxor.u32 %v2227, 2147483648
        %v2244 = vxor.u32 %v2228, 2147483648
        %v2245 = vxor.u32 %v2229, 2147483648
        %v2246 = vxor.u32 %v2230, 2147483648
        %v2247 = vxor.u32 %v2231, 2147483648
        %v2248 = vxor.u32 %v2232, 2147483648
        %v2249 = vxor.u32 %v2233, 2147483648
        %v2250 = vxor.u32 %v2234, 2147483648
        %v2251 = vxor.u32 %v2235, 2147483648
        %v2252 = vxor.u32 %v2236, 2147483648
        %v2253 = vxor.u32 %v2237, 2147483648
        %v2254 = vmul.f32 %v2238, 1.442695
        %v2255 = vpow.pop %v2254
        %v2256 = vmul.f32 %v2239, 1.442695
        %v2257 = vpow.pop %v2256
        %v2258 = vmul.f32 %v2240, 1.442695
        %v2259 = vpow.pop %v2258
        %v2260 = vmul.f32 %v2241, 1.442695
        %v2261 = vpow.pop %v2260
        %v2262 = vmul.f32 %v2242, 1.442695
        %v2263 = vpow.pop %v2262
        %v2264 = vmul.f32 %v2243, 1.442695
        %v2265 = vpow.pop %v2264
        %v2266 = vmul.f32 %v2244, 1.442695
        %v2267 = vpow.pop %v2266
        %v2268 = vmul.f32 %v2245, 1.442695
        %v2269 = vpow.pop %v2268
        %v2270 = vmul.f32 %v2246, 1.442695
        %v2271 = vpow.pop %v2270
        %v2272 = vmul.f32 %v2247, 1.442695
        %v2273 = vpow.pop %v2272
        %v2274 = vmul.f32 %v2248, 1.442695
        %v2275 = vpow.pop %v2274
        %v2276 = vmul.f32 %v2249, 1.442695
        %v2277 = vpow.pop %v2276
        %v2278 = vmul.f32 %v2250, 1.442695
        %v2279 = vpow.pop %v2278
        %v2280 = vmul.f32 %v2251, 1.442695
        %v2281 = vpow.pop %v2280
        %v2282 = vmul.f32 %v2252, 1.442695
        %v2283 = vpow.pop %v2282
        %v2284 = vmul.f32 %v2253, 1.442695
        %v2285 = vpow.pop %v2284
        %v2286 = vadd.f32 %v2255, 1.0
        %v2287 = vadd.f32 %v2257, 1.0
        %v2288 = vadd.f32 %v2259, 1.0
        %v2289 = vadd.f32 %v2261, 1.0
        %v2290 = vadd.f32 %v2263, 1.0
        %v2291 = vadd.f32 %v2265, 1.0
        %v2292 = vadd.f32 %v2267, 1.0
        %v2293 = vadd.f32 %v2269, 1.0
        %v2294 = vadd.f32 %v2271, 1.0
        %v2295 = vadd.f32 %v2273, 1.0
        %v2296 = vadd.f32 %v2275, 1.0
        %v2297 = vadd.f32 %v2277, 1.0
        %v2298 = vadd.f32 %v2279, 1.0
        %v2299 = vadd.f32 %v2281, 1.0
        %v2300 = vadd.f32 %v2283, 1.0
        %v2301 = vadd.f32 %v2285, 1.0
        %v2302 = vrcp.pop %v2286
        %v2303 = vmul.f32 1.0, %v2302
        %v2304 = vrcp.pop %v2287
        %v2305 = vmul.f32 1.0, %v2304
        %v2306 = vrcp.pop %v2288
        %v2307 = vmul.f32 1.0, %v2306
        %v2308 = vrcp.pop %v2289
        %v2309 = vmul.f32 1.0, %v2308
        %v2310 = vrcp.pop %v2290
        %v2311 = vmul.f32 1.0, %v2310
        %v2312 = vrcp.pop %v2291
        %v2313 = vmul.f32 1.0, %v2312
        %v2314 = vrcp.pop %v2292
        %v2315 = vmul.f32 1.0, %v2314
        %v2316 = vrcp.pop %v2293
        %v2317 = vmul.f32 1.0, %v2316
        %v2318 = vrcp.pop %v2294
        %v2319 = vmul.f32 1.0, %v2318
        %v2320 = vrcp.pop %v2295
        %v2321 = vmul.f32 1.0, %v2320
        %v2322 = vrcp.pop %v2296
        %v2323 = vmul.f32 1.0, %v2322
        %v2324 = vrcp.pop %v2297
        %v2325 = vmul.f32 1.0, %v2324
        %v2326 = vrcp.pop %v2298
        %v2327 = vmul.f32 1.0, %v2326
        %v2328 = vrcp.pop %v2299
        %v2329 = vmul.f32 1.0, %v2328
        %v2330 = vrcp.pop %v2300
        %v2331 = vmul.f32 1.0, %v2330
        %v2332 = vrcp.pop %v2301
        %v2333 = vmul.f32 1.0, %v2332
        %v2334 = vtanh.pop %v2190
        %v2335 = vtanh.pop %v2191
        %v2336 = vtanh.pop %v2192
        %v2337 = vtanh.pop %v2193
        %v2338 = vtanh.pop %v2194
        %v2339 = vtanh.pop %v2195
        %v2340 = vtanh.pop %v2196
        %v2341 = vtanh.pop %v2197
        %v2342 = vtanh.pop %v2198
        %v2343 = vtanh.pop %v2199
        %v2344 = vtanh.pop %v2200
        %v2345 = vtanh.pop %v2201
        %v2346 = vtanh.pop %v2202
        %v2347 = vtanh.pop %v2203
        %v2348 = vtanh.pop %v2204
        %v2349 = vtanh.pop %v2205
        %v2350 = vmul.f32 %v2303, %v2334
        %v2351 = vmul.f32 %v2305, %v2335
        %v2352 = vmul.f32 %v2307, %v2336
        %v2353 = vmul.f32 %v2309, %v2337
        %v2354 = vmul.f32 %v2311, %v2338
        %v2355 = vmul.f32 %v2313, %v2339
        %v2356 = vmul.f32 %v2315, %v2340
        %v2357 = vmul.f32 %v2317, %v2341
        %v2358 = vmul.f32 %v2319, %v2342
        %v2359 = vmul.f32 %v2321, %v2343
        %v2360 = vmul.f32 %v2323, %v2344
        %v2361 = vmul.f32 %v2325, %v2345
        %v2362 = vmul.f32 %v2327, %v2346
        %v2363 = vmul.f32 %v2329, %v2347
        %v2364 = vmul.f32 %v2331, %v2348
        %v2365 = vmul.f32 %v2333, %v2349
        %2366 = vst [vmem:[%s526] sm:$0xff] %v2350
        %2367 = vst [vmem:[%s526 + $0x8] sm:$0xff] %v2351
        %2368 = vst [vmem:[%s526 + $0x10] sm:$0xff] %v2352
        %2369 = vst [vmem:[%s526 + $0x18] sm:$0xff] %v2353
        %2370 = vst [vmem:[%s526 + $0x20] sm:$0xff] %v2354
        %2371 = vst [vmem:[%s526 + $0x28] sm:$0xff] %v2355
        %2372 = vst [vmem:[%s526 + $0x30] sm:$0xff] %v2356
        %2373 = vst [vmem:[%s526 + $0x38] sm:$0xff] %v2357
        %2374 = vst [vmem:[%s526 + $0x40] sm:$0xff] %v2358
        %2375 = vst [vmem:[%s526 + $0x48] sm:$0xff] %v2359
        %2376 = vst [vmem:[%s526 + $0x50] sm:$0xff] %v2360
        %2377 = vst [vmem:[%s526 + $0x58] sm:$0xff] %v2361
        %2378 = vst [vmem:[%s526 + $0x60] sm:$0xff] %v2362
        %2379 = vst [vmem:[%s526 + $0x68] sm:$0xff] %v2363
        %2380 = vst [vmem:[%s526 + $0x70] sm:$0xff] %v2364
        %2381 = vst [vmem:[%s526 + $0x78] sm:$0xff] %v2365
        %2382 = vst [vmem:[%s532] sm:$0xff] %v2190
        %2383 = vst [vmem:[%s532 + $0x8] sm:$0xff] %v2191
        %2384 = vst [vmem:[%s532 + $0x10] sm:$0xff] %v2192
        %2385 = vst [vmem:[%s532 + $0x18] sm:$0xff] %v2193
        %2386 = vst [vmem:[%s532 + $0x20] sm:$0xff] %v2194
        %2387 = vst [vmem:[%s532 + $0x28] sm:$0xff] %v2195
        %2388 = vst [vmem:[%s532 + $0x30] sm:$0xff] %v2196
        %2389 = vst [vmem:[%s532 + $0x38] sm:$0xff] %v2197
        %2390 = vst [vmem:[%s532 + $0x40] sm:$0xff] %v2198
        %2391 = vst [vmem:[%s532 + $0x48] sm:$0xff] %v2199
        %2392 = vst [vmem:[%s532 + $0x50] sm:$0xff] %v2200
        %2393 = vst [vmem:[%s532 + $0x58] sm:$0xff] %v2201
        %2394 = vst [vmem:[%s532 + $0x60] sm:$0xff] %v2202
        %2395 = vst [vmem:[%s532 + $0x68] sm:$0xff] %v2203
        %2396 = vst [vmem:[%s532 + $0x70] sm:$0xff] %v2204
        %2397 = vst [vmem:[%s532 + $0x78] sm:$0xff] %v2205
        %s2398 = sand.u32 %s141, 1
        %s2399 = sand.u32 %s141, 1
        %s2400 = smul.addr %s2399, 128
        %s2401 = scalar_lea.vmem [#allocation4], %s2400
        %s2402 = sand.u32 %s167, 1
        %s2403 = sand.u32 %s167, 1
        %s2404 = smul.addr %s2403, 128
        %s2405 = scalar_lea.vmem [#allocation5], %s2404
        // Predicated region
        $region87: #{convlstm_cell_forward.1} parent=77 // pred_check
          %p2406 = pneg %p151
        $region88: #{convlstm_cell_forward.1} parent=77 // pred_check_branch
          %2408 = sbr.rel (%p2406) target = $region90
        $region89: #{convlstm_cell_forward.1} parent=77 // pred_region
          %s2409 = smul.u32 4, %s18
          %s2410 = smul.addr %s2409, 8
          %s2411 = scalar_lea.vmem %s5, %s2410
          // Predicated region
          $region91: #{convlstm_cell_forward.1} parent=89 // pred_check
            _
          $region92: #{convlstm_cell_forward.1} parent=89 // pred_check_branch
            %2413 = sbr.rel (0) target = $region94
          $region93: #{convlstm_cell_forward.1} parent=89 // pred_region
            // Predicated region
            $region95: #{convlstm_cell_forward.1} parent=93 // pred_check
              _
            $region96: #{convlstm_cell_forward.1} parent=93 // pred_check_branch
              %2415 = sbr.rel (0) target = $region98
            $region97: #{convlstm_cell_forward.1} parent=93 // pred_region
              loop: start=0, step=1, limit=1
              $region99: #{convlstm_cell_forward.1} parent=97 // loop_pre_header
                _
              $region100: #{convlstm_cell_forward.1} parent=97 // loop_header
                %s2417 = sphi 0, %s2421
                %p2418 = scmp.ge.s32.totalorder %s2417, 1
                %s2422 = sphi %s2401, %s2401
                %s2423 = sphi %s2411, %s2411
              $region101: #{convlstm_cell_forward.1} parent=97 // loop_header_branch
                %2420 = sbr.rel (%p2418) target = $region105
              $region102: #{convlstm_cell_forward.1} parent=97 // loop_body
                %v2424 = vld [vmem:[%s2422] sm:$0xff]
                %2425 = vst [vmem:[%s2423] sm:$0xff] %v2424
                %v2426 = vld [vmem:[%s2422 + $0x8] sm:$0xff]
                %2427 = vst [vmem:[%s2423 + $0x8] sm:$0xff] %v2426
                %v2428 = vld [vmem:[%s2422 + $0x10] sm:$0xff]
                %2429 = vst [vmem:[%s2423 + $0x10] sm:$0xff] %v2428
                %v2430 = vld [vmem:[%s2422 + $0x18] sm:$0xff]
                %2431 = vst [vmem:[%s2423 + $0x18] sm:$0xff] %v2430
                %v2432 = vld [vmem:[%s2422 + $0x20] sm:$0xff]
                %2433 = vst [vmem:[%s2423 + $0x80] sm:$0xff] %v2432
                %v2434 = vld [vmem:[%s2422 + $0x28] sm:$0xff]
                %2435 = vst [vmem:[%s2423 + $0x88] sm:$0xff] %v2434
                %v2436 = vld [vmem:[%s2422 + $0x30] sm:$0xff]
                %2437 = vst [vmem:[%s2423 + $0x90] sm:$0xff] %v2436
                %v2438 = vld [vmem:[%s2422 + $0x38] sm:$0xff]
                %2439 = vst [vmem:[%s2423 + $0x98] sm:$0xff] %v2438
                %v2440 = vld [vmem:[%s2422 + $0x40] sm:$0xff]
                %2441 = vst [vmem:[%s2423 + $0x100] sm:$0xff] %v2440
                %v2442 = vld [vmem:[%s2422 + $0x48] sm:$0xff]
                %2443 = vst [vmem:[%s2423 + $0x108] sm:$0xff] %v2442
                %v2444 = vld [vmem:[%s2422 + $0x50] sm:$0xff]
                %2445 = vst [vmem:[%s2423 + $0x110] sm:$0xff] %v2444
                %v2446 = vld [vmem:[%s2422 + $0x58] sm:$0xff]
                %2447 = vst [vmem:[%s2423 + $0x118] sm:$0xff] %v2446
                %v2448 = vld [vmem:[%s2422 + $0x60] sm:$0xff]
                %2449 = vst [vmem:[%s2423 + $0x180] sm:$0xff] %v2448
                %v2450 = vld [vmem:[%s2422 + $0x68] sm:$0xff]
                %2451 = vst [vmem:[%s2423 + $0x188] sm:$0xff] %v2450
                %v2452 = vld [vmem:[%s2422 + $0x70] sm:$0xff]
                %2453 = vst [vmem:[%s2423 + $0x190] sm:$0xff] %v2452
                %v2454 = vld [vmem:[%s2422 + $0x78] sm:$0xff]
                %2455 = vst [vmem:[%s2423 + $0x198] sm:$0xff] %v2454
              $region103: #{convlstm_cell_forward.1} parent=97 // loop_footer
                %s2421 = sadd.s32 1, %s2417
              $region104: #{convlstm_cell_forward.1} parent=97 // loop_footer_branch
                %2416 = sbr.rel target = $region100
              $region105: #{convlstm_cell_forward.1} parent=97 // loop_exit
                _
            $region98: #{convlstm_cell_forward.1} parent=93 // pred_fallthru
              _
            // Predicated region
            $region106: #{convlstm_cell_forward.1} parent=93 // pred_check
              _
            $region107: #{convlstm_cell_forward.1} parent=93 // pred_check_branch
              %2457 = sbr.rel target = $region109
            $region108: #{convlstm_cell_forward.1} parent=93 // pred_region
              _
            $region109: #{convlstm_cell_forward.1} parent=93 // pred_fallthru
              _
          $region94: #{convlstm_cell_forward.1} parent=89 // pred_fallthru
            _
          %2458 = vnop
        $region90: #{convlstm_cell_forward.1} parent=77 // pred_fallthru
          _
        // Predicated region
        $region110: #{convlstm_cell_forward.1} parent=77 // pred_check
          %p2459 = pneg %p177
        $region111: #{convlstm_cell_forward.1} parent=77 // pred_check_branch
          %2461 = sbr.rel (%p2459) target = $region113
        $region112: #{convlstm_cell_forward.1} parent=77 // pred_region
          %s2462 = smul.u32 4, %s18
          %s2463 = smul.addr %s2462, 8
          %s2464 = scalar_lea.vmem %s6, %s2463
          // Predicated region
          $region114: #{convlstm_cell_forward.1} parent=112 // pred_check
            _
          $region115: #{convlstm_cell_forward.1} parent=112 // pred_check_branch
            %2466 = sbr.rel (0) target = $region117
          $region116: #{convlstm_cell_forward.1} parent=112 // pred_region
            // Predicated region
            $region118: #{convlstm_cell_forward.1} parent=116 // pred_check
              _
            $region119: #{convlstm_cell_forward.1} parent=116 // pred_check_branch
              %2468 = sbr.rel (0) target = $region121
            $region120: #{convlstm_cell_forward.1} parent=116 // pred_region
              loop: start=0, step=1, limit=1
              $region122: #{convlstm_cell_forward.1} parent=120 // loop_pre_header
                _
              $region123: #{convlstm_cell_forward.1} parent=120 // loop_header
                %s2470 = sphi 0, %s2474
                %p2471 = scmp.ge.s32.totalorder %s2470, 1
                %s2475 = sphi %s2405, %s2405
                %s2476 = sphi %s2464, %s2464
              $region124: #{convlstm_cell_forward.1} parent=120 // loop_header_branch
                %2473 = sbr.rel (%p2471) target = $region128
              $region125: #{convlstm_cell_forward.1} parent=120 // loop_body
                %v2477 = vld [vmem:[%s2475] sm:$0xff]
                %2478 = vst [vmem:[%s2476] sm:$0xff] %v2477
                %v2479 = vld [vmem:[%s2475 + $0x8] sm:$0xff]
                %2480 = vst [vmem:[%s2476 + $0x8] sm:$0xff] %v2479
                %v2481 = vld [vmem:[%s2475 + $0x10] sm:$0xff]
                %2482 = vst [vmem:[%s2476 + $0x10] sm:$0xff] %v2481
                %v2483 = vld [vmem:[%s2475 + $0x18] sm:$0xff]
                %2484 = vst [vmem:[%s2476 + $0x18] sm:$0xff] %v2483
                %v2485 = vld [vmem:[%s2475 + $0x20] sm:$0xff]
                %2486 = vst [vmem:[%s2476 + $0x80] sm:$0xff] %v2485
                %v2487 = vld [vmem:[%s2475 + $0x28] sm:$0xff]
                %2488 = vst [vmem:[%s2476 + $0x88] sm:$0xff] %v2487
                %v2489 = vld [vmem:[%s2475 + $0x30] sm:$0xff]
                %2490 = vst [vmem:[%s2476 + $0x90] sm:$0xff] %v2489
                %v2491 = vld [vmem:[%s2475 + $0x38] sm:$0xff]
                %2492 = vst [vmem:[%s2476 + $0x98] sm:$0xff] %v2491
                %v2493 = vld [vmem:[%s2475 + $0x40] sm:$0xff]
                %2494 = vst [vmem:[%s2476 + $0x100] sm:$0xff] %v2493
                %v2495 = vld [vmem:[%s2475 + $0x48] sm:$0xff]
                %2496 = vst [vmem:[%s2476 + $0x108] sm:$0xff] %v2495
                %v2497 = vld [vmem:[%s2475 + $0x50] sm:$0xff]
                %2498 = vst [vmem:[%s2476 + $0x110] sm:$0xff] %v2497
                %v2499 = vld [vmem:[%s2475 + $0x58] sm:$0xff]
                %2500 = vst [vmem:[%s2476 + $0x118] sm:$0xff] %v2499
                %v2501 = vld [vmem:[%s2475 + $0x60] sm:$0xff]
                %2502 = vst [vmem:[%s2476 + $0x180] sm:$0xff] %v2501
                %v2503 = vld [vmem:[%s2475 + $0x68] sm:$0xff]
                %2504 = vst [vmem:[%s2476 + $0x188] sm:$0xff] %v2503
                %v2505 = vld [vmem:[%s2475 + $0x70] sm:$0xff]
                %2506 = vst [vmem:[%s2476 + $0x190] sm:$0xff] %v2505
                %v2507 = vld [vmem:[%s2475 + $0x78] sm:$0xff]
                %2508 = vst [vmem:[%s2476 + $0x198] sm:$0xff] %v2507
              $region126: #{convlstm_cell_forward.1} parent=120 // loop_footer
                %s2474 = sadd.s32 1, %s2470
              $region127: #{convlstm_cell_forward.1} parent=120 // loop_footer_branch
                %2469 = sbr.rel target = $region123
              $region128: #{convlstm_cell_forward.1} parent=120 // loop_exit
                _
            $region121: #{convlstm_cell_forward.1} parent=116 // pred_fallthru
              _
            // Predicated region
            $region129: #{convlstm_cell_forward.1} parent=116 // pred_check
              _
            $region130: #{convlstm_cell_forward.1} parent=116 // pred_check_branch
              %2510 = sbr.rel target = $region132
            $region131: #{convlstm_cell_forward.1} parent=116 // pred_region
              _
            $region132: #{convlstm_cell_forward.1} parent=116 // pred_fallthru
              _
          $region117: #{convlstm_cell_forward.1} parent=112 // pred_fallthru
            _
          %2511 = vnop
        $region113: #{convlstm_cell_forward.1} parent=77 // pred_fallthru
          _
      $region78: #{convlstm_cell_forward.1} parent=5 // pred_fallthru
        _
      %p2512 = scmp.le.s32.totalorder 2, %s13
      // Predicated region
      $region133: #{convlstm_cell_forward.1} parent=5 // pred_check
        %p2513 = pneg %p2512
      $region134: #{convlstm_cell_forward.1} parent=5 // pred_check_branch
        %2515 = sbr.rel (%p2513) target = $region136
      $region135: #{convlstm_cell_forward.1} parent=5 // pred_region
        %s2516 = ssub.s32 %s13, 2
        // Predicated region
        $region137: #{convlstm_cell_forward.1} parent=135 // pred_check
          %p2517 = pneg %p157
        $region138: #{convlstm_cell_forward.1} parent=135 // pred_check_branch
          %2519 = sbr.rel (%p2517) target = $region140
        $region139: #{convlstm_cell_forward.1} parent=135 // pred_region
          %s2520 = sand.u32 %s142, 1
          %s2521 = sand.u32 %s142, 1
          %s2522 = smul.addr %s2521, 128
          %s2523 = scalar_lea.vmem [#allocation4], %s2522
        $region140: #{convlstm_cell_forward.1} parent=135 // pred_fallthru
          _
        // Predicated region
        $region141: #{convlstm_cell_forward.1} parent=135 // pred_check
          %p2524 = pneg %p183
        $region142: #{convlstm_cell_forward.1} parent=135 // pred_check_branch
          %2526 = sbr.rel (%p2524) target = $region144
        $region143: #{convlstm_cell_forward.1} parent=135 // pred_region
          %s2527 = sand.u32 %s168, 1
          %s2528 = sand.u32 %s168, 1
          %s2529 = smul.addr %s2528, 128
          %s2530 = scalar_lea.vmem [#allocation5], %s2529
        $region144: #{convlstm_cell_forward.1} parent=135 // pred_fallthru
          _
      $region136: #{convlstm_cell_forward.1} parent=5 // pred_fallthru
        _
    $region6: #{convlstm_cell_forward.1} parent=1 // loop_footer
      %s17 = sadd.s32 1, %s13
    $region7: #{convlstm_cell_forward.1} parent=1 // loop_footer_branch
      %12 = sbr.rel target = $region3
    $region8: #{convlstm_cell_forward.1} parent=1 // loop_exit
      _

</llo_original>
